<compile_context>
chip_gen: v5e
topology: v5e:2x2
jax: 0.10.0
libtpu: 0.0.40
codegen_flags: <defaults>
</compile_context>

<pallas_src>
import functools
import math

import jax
import jax.numpy as jnp
from jax import lax
from jax.experimental import pallas as pl
from jax.experimental.pallas import tpu as pltpu

RMS_EPS = 1e-6
NEG_INF = -1e9
ROPE_THETA = 10000.0


# ---------------------------------------------------------------------------
# Shared math helpers
# ---------------------------------------------------------------------------
def _rmsnorm(x, w):
    var = jnp.mean(x * x, axis=-1, keepdims=True)
    return x * lax.rsqrt(var + RMS_EPS) * w


def _rope_tables(seq_len, head_dim):
    inv = 1.0 / (ROPE_THETA ** (jnp.arange(0, head_dim, 2, dtype=jnp.float32) / head_dim))
    freqs = jnp.arange(seq_len, dtype=jnp.float32)[:, None] * inv[None, :]
    emb = jnp.concatenate([freqs, freqs], axis=-1)          # (S, hd)
    return jnp.cos(emb), jnp.sin(emb)


def _rope_full_tables(batch, seq_len, d_model, n_head):
    """Head-tiled, batch-tiled RoPE tables with the rotate-half sign folded in.

    rope(t) = t*cos_f + roll(t,+hd/2)*sin_a + roll(t,-hd/2)*sin_b, applied to
    the full (B*S, D) q/k in one shot (sin_a/sin_b are zero at positions where
    the corresponding full-width roll would wrap across a head boundary).
    """
    hd = d_model // n_head
    cos, sin = _rope_tables(seq_len, hd)                     # (S, hd)
    first = (jnp.arange(hd) < hd // 2).astype(jnp.float32)[None, :]
    sin_a = -sin * first            # multiplies t[(g + hd/2) mod D]
    sin_b = sin * (1.0 - first)     # multiplies t[(g - hd/2) mod D]
    tile = lambda t: jnp.tile(t, (batch, n_head))            # (B*S, D)
    return tile(cos), tile(sin_a), tile(sin_b)


def _causal_bias(seq_len):
    r = jnp.arange(seq_len)
    return jnp.where(r[:, None] >= r[None, :], 0.0, NEG_INF).astype(jnp.float32)


def _vmem_limit_bytes():
    cap = 128 << 20
    try:
        cap = int(getattr(pltpu.get_tpu_info(), "vmem_capacity_bytes", cap))
    except Exception:
        pass
    return max(32 << 20, min((cap * 3) // 4, 100 << 20))


# ---------------------------------------------------------------------------
# Pallas kernels
# ---------------------------------------------------------------------------
def llama_layers_kernel(x_ref, cos_ref, sina_ref, sinb_ref, bias_ref,
                        ln1_ref, wqkv_ref, wo_ref,
                        ln2_ref, wgu_ref, wdown_ref, lnf_ref,
                        o_ref, resid_ref, qkv_ref, ctx_ref,
                        *, n_head, batch):
    """All decoder layers for the whole (flattened) batch; grid = (layer,)."""
    layer = pl.program_id(0)
    n_layers = pl.num_programs(0)
    M, D = x_ref.shape
    S = M // batch
    hd = D // n_head
    half = hd // 2
    scale = 1.0 / math.sqrt(hd)

    @pl.when(layer == 0)
    def _():
        resid_ref[...] = x_ref[...].astype(jnp.float32)      # bf16 in, f32 residual

    x = resid_ref[...]                                       # (M, D) f32
    cos = cos_ref[...]
    sin_a = sina_ref[...]
    sin_b = sinb_ref[...]
    bias = bias_ref[...]                                     # (S, S) additive mask

    def rope(t):
        # full-width rotate-half: two static rolls + head-tiled masked sin tables
        a = jnp.concatenate([t[:, half:], t[:, :half]], axis=-1)          # t[(g+half) mod D]
        b = jnp.concatenate([t[:, D - half:], t[:, :D - half]], axis=-1)  # t[(g-half) mod D]
        return t * cos + a * sin_a + b * sin_b

    # ---- self attention: RMSNorm -> QKV -> RoPE -> causal softmax -> O ----
    h1 = _rmsnorm(x, ln1_ref[0])
    qkv = jnp.dot(h1.astype(jnp.bfloat16), wqkv_ref[0],
                  preferred_element_type=jnp.float32)        # (M, 3D)

    # Stage rotated q | k | v in VMEM scratch; subsequent reads are ref loads.
    qkv_ref[:, pl.ds(0, D)] = rope(qkv[:, :D] * scale)
    qkv_ref[:, pl.ds(D, D)] = rope(qkv[:, D:2 * D])
    qkv_ref[:, pl.ds(2 * D, D)] = qkv[:, 2 * D:]

    for b_i in range(batch):
        rows = pl.ds(b_i * S, S)
        qkv_b = qkv_ref[rows, :]                             # (S, 3D) f32
        for h_i in range(n_head):
            lo = h_i * hd
            qh = qkv_b[:, lo:lo + hd].astype(jnp.bfloat16)
            kh = qkv_b[:, D + lo:D + lo + hd].astype(jnp.bfloat16)
            vh = qkv_b[:, 2 * D + lo:2 * D + lo + hd].astype(jnp.bfloat16)
            s = jnp.dot(qh, kh.T, preferred_element_type=jnp.float32) + bias
            s = s - jnp.max(s, axis=-1, keepdims=True)
            p = jnp.exp(s)
            p = p * pl.reciprocal(jnp.sum(p, axis=-1, keepdims=True), approx=True)
            ctx = jnp.dot(p.astype(jnp.bfloat16), vh,
                          preferred_element_type=jnp.float32)          # (S, hd)
            ctx_ref[rows, pl.ds(lo, hd)] = ctx

    # Single output projection over all batches / heads at once.
    attn = jnp.dot(ctx_ref[...].astype(jnp.bfloat16), wo_ref[0],
                   preferred_element_type=jnp.float32)
    x = x + attn

    # ---- MLP (SwiGLU: down(silu(gate) * up)) ----
    h2 = _rmsnorm(x, ln2_ref[0]).astype(jnp.bfloat16)
    gu = jnp.dot(h2, wgu_ref[0], preferred_element_type=jnp.float32)   # (M, 2I)
    inter = gu.shape[-1] // 2
    gate = gu[:, :inter]
    up = gu[:, inter:]
    act = gate * pl.reciprocal(1.0 + jnp.exp(-gate), approx=True) * up
    x = x + jnp.dot(act.astype(jnp.bfloat16), wdown_ref[0],
                    preferred_element_type=jnp.float32)

    resid_ref[...] = x

    # Fused final RMSNorm in the last-layer epilogue; bf16 hidden hand-off.
    @pl.when(layer == n_layers - 1)
    def _():
        o_ref[...] = _rmsnorm(x, lnf_ref[...]).astype(o_ref.dtype)


def lm_head_kernel(h_ref, w_ref, o_ref):
    """Pure (M, D) @ (D, tv) vocab-tile matmul (hidden already normalized)."""
    o_ref[...] = jnp.dot(h_ref[...], w_ref[...],
                         preferred_element_type=jnp.float32)


# ---------------------------------------------------------------------------
# Wrappers
# ---------------------------------------------------------------------------
def run_layers(x2d, cos_f, sin_a, sin_b, bias, layers, final_norm, n_head, batch):
    M, D = x2d.shape
    S = bias.shape[0]
    L = layers["w_qkv"].shape[0]
    two_i = layers["w_gu"].shape[-1]
    d_ff = layers["w_down"].shape[1]
    kernel = functools.partial(llama_layers_kernel, n_head=n_head, batch=batch)
    return pl.pallas_call(
        kernel,
        out_shape=jax.ShapeDtypeStruct((M, D), jnp.bfloat16),
        grid=(L,),
        in_specs=[
            pl.BlockSpec((M, D), lambda l: (0, 0)),            # x (bf16)
            pl.BlockSpec((M, D), lambda l: (0, 0)),            # cos
            pl.BlockSpec((M, D), lambda l: (0, 0)),            # sin_a
            pl.BlockSpec((M, D), lambda l: (0, 0)),            # sin_b
            pl.BlockSpec((S, S), lambda l: (0, 0)),            # causal bias
            pl.BlockSpec((1, 1, D), lambda l: (l, 0, 0)),      # ln1
            pl.BlockSpec((1, D, 3 * D), lambda l: (l, 0, 0)),  # w_qkv
            pl.BlockSpec((1, D, D), lambda l: (l, 0, 0)),      # w_o
            pl.BlockSpec((1, 1, D), lambda l: (l, 0, 0)),      # ln2
            pl.BlockSpec((1, D, two_i), lambda l: (l, 0, 0)),  # w_gate|up
            pl.BlockSpec((1, d_ff, D), lambda l: (l, 0, 0)),   # w_down
            pl.BlockSpec((1, D), lambda l: (0, 0)),            # final norm gain
        ],
        out_specs=pl.BlockSpec((M, D), lambda l: (0, 0)),
        scratch_shapes=[
            pltpu.VMEM((M, D), jnp.float32),       # residual stream
            pltpu.VMEM((M, 3 * D), jnp.float32),   # staged rope'd q|k|v
            pltpu.VMEM((M, D), jnp.float32),       # per-head context staging
        ],
        compiler_params=pltpu.CompilerParams(
            dimension_semantics=("arbitrary",),
            vmem_limit_bytes=_vmem_limit_bytes()),
    )(x2d, cos_f, sin_a, sin_b, bias, layers["ln1"], layers["w_qkv"],
      layers["w_o"], layers["ln2"], layers["w_gu"], layers["w_down"], final_norm)


def _pick_vocab_tile(v, pref=2048):
    if v <= pref:
        return v
    for t in (pref, 1024, 512, 256, 128):
        if v % t == 0:
            return t
    return v


def run_lm_head(h2d, w_lm_t):
    M, D = h2d.shape
    V = w_lm_t.shape[1]
    tv = _pick_vocab_tile(V)
    return pl.pallas_call(
        lm_head_kernel,
        out_shape=jax.ShapeDtypeStruct((M, V), jnp.float32),
        grid=(V // tv,),
        in_specs=[
            pl.BlockSpec((M, D), lambda j: (0, 0)),
            pl.BlockSpec((D, tv), lambda j: (0, j)),
        ],
        out_specs=pl.BlockSpec((M, tv), lambda j: (0, j)),
        compiler_params=pltpu.CompilerParams(
            dimension_semantics=("parallel",),
            vmem_limit_bytes=_vmem_limit_bytes()),
    )(h2d, w_lm_t)


def llama_forward(tokens, params, n_head):
    """LlamaForCausalLM forward: tokens (B, S) -> logits (B, S, V)."""
    B, S = tokens.shape
    # Embedding gather is glue (plain JAX); everything else is in Pallas.
    emb = jnp.take(params["embed"], tokens, axis=0)            # (B, S, D) bf16
    D = emb.shape[-1]
    x2d = emb.reshape(B * S, D)
    cos_f, sin_a, sin_b = _rope_full_tables(B, S, D, n_head)
    bias = _causal_bias(S)
    h2d = run_layers(x2d, cos_f, sin_a, sin_b, bias,
                     params["layers"], params["final_norm"], n_head, B)
    logits = run_lm_head(h2d, params["lm_head_t"])
    return logits.reshape(B, S, -1)


# ---------------------------------------------------------------------------
# Pure-JAX reference (HF-style math, same bf16 cast points) for verification
# ---------------------------------------------------------------------------
def _rope_ref(t, cos, sin):
    half = t.shape[-1] // 2
    t1 = t[..., :half]
    t2 = t[..., half:]
    rot = jnp.concatenate([-t2, t1], axis=-1)
    return t * cos + rot * sin


def _silu_ref(x):
    return x * (1.0 / (1.0 + jnp.exp(-x)))


def ref_forward(tokens, params, n_head):
    x = jnp.take(params["embed"], tokens, axis=0).astype(jnp.float32)
    B, S, D = x.shape
    hd = D // n_head
    scale = 1.0 / math.sqrt(hd)
    cos, sin = _rope_tables(S, hd)
    row = lax.broadcasted_iota(jnp.int32, (S, S), 0)
    col = lax.broadcasted_iota(jnp.int32, (S, S), 1)
    causal = col <= row
    L = params["layers"]["w_qkv"].shape[0]
    for li in range(L):
        ly = {k: v[li] for k, v in params["layers"].items()}
        h = _rmsnorm(x, ly["ln1"])
        qkv = jnp.dot(h.astype(jnp.bfloat16), ly["w_qkv"],
                      preferred_element_type=jnp.float32)
        q, k, v = qkv[..., :D], qkv[..., D:2 * D], qkv[..., 2 * D:]
        q = q.reshape(B, S, n_head, hd).transpose(0, 2, 1, 3)
        k = k.reshape(B, S, n_head, hd).transpose(0, 2, 1, 3)
        v = v.reshape(B, S, n_head, hd).transpose(0, 2, 1, 3)
        q = (_rope_ref(q, cos, sin) * scale).astype(jnp.bfloat16)
        k = _rope_ref(k, cos, sin).astype(jnp.bfloat16)
        v = v.astype(jnp.bfloat16)
        s = jnp.einsum("bhqd,bhkd->bhqk", q, k, preferred_element_type=jnp.float32)
        s = jnp.where(causal, s, NEG_INF)
        s = s - jnp.max(s, axis=-1, keepdims=True)
        p = jnp.exp(s)
        p = p / jnp.sum(p, axis=-1, keepdims=True)
        ctx = jnp.einsum("bhqk,bhkd->bhqd", p.astype(jnp.bfloat16), v,
                         preferred_element_type=jnp.float32)
        ctx = ctx.transpose(0, 2, 1, 3).reshape(B, S, D)
        x = x + jnp.dot(ctx.astype(jnp.bfloat16), ly["w_o"],
                        preferred_element_type=jnp.float32)
        h2 = _rmsnorm(x, ly["ln2"]).astype(jnp.bfloat16)
        gu = jnp.dot(h2, ly["w_gu"], preferred_element_type=jnp.float32)
        inter = gu.shape[-1] // 2
        act = _silu_ref(gu[..., :inter]) * gu[..., inter:]
        x = x + jnp.dot(act.astype(jnp.bfloat16), ly["w_down"],
                        preferred_element_type=jnp.float32)
    h = _rmsnorm(x, params["final_norm"])
    return jnp.dot(h.astype(jnp.bfloat16), params["lm_head_t"],
                   preferred_element_type=jnp.float32)


# ---------------------------------------------------------------------------
# Deterministic synthetic parameters (bf16 weights, f32 norm gains)
# ---------------------------------------------------------------------------
def init_params(key, vocab_size, d_model, n_layers, d_ff):
    std = 0.02
    n_keys = 3 + 6 * n_layers
    keys = jax.random.split(key, n_keys)

    def w(k, shape):
        return (std * jax.random.normal(k, shape, jnp.float32)).astype(jnp.bfloat16)

    def g(k, shape):
        return 1.0 + 0.1 * jax.random.normal(k, shape, jnp.float32)

    params = {
        "embed": w(keys[0], (vocab_size, d_model)),
        # LM head pre-transposed to (D, V) once at init.
        "lm_head_t": w(keys[1], (d_model, vocab_size)),
        "final_norm": g(keys[2], (1, d_model)),
    }
    layers = {"ln1": [], "w_qkv": [], "w_o": [], "ln2": [], "w_gu": [], "w_down": []}
    for li in range(n_layers):
        k0, k1, k2, k3, k4, k5 = keys[3 + 6 * li: 3 + 6 * li + 6]
        layers["ln1"].append(g(k0, (1, d_model)))
        layers["w_qkv"].append(w(k1, (d_model, 3 * d_model)))
        layers["w_o"].append(w(k2, (d_model, d_model)))
        layers["ln2"].append(g(k3, (1, d_model)))
        layers["w_gu"].append(w(k4, (d_model, 2 * d_ff)))      # [gate | up]
        layers["w_down"].append(w(k5, (d_ff, d_model)))
    params["layers"] = {k: jnp.stack(v, axis=0) for k, v in layers.items()}
    return params


if __name__ == "__main__":
    # Small Llama-shaped config: batch=2, seq=8, hidden=32, heads=4, layers=2,
    # ffn=64, vocab=64 (resize_token_embeddings -> vocab_size).
    B, S = 2, 8
    VOCAB = 64
    D = 32
    N_HEAD = 4
    N_LAYER = 2
    D_FF = 64

    root = jax.random.PRNGKey(0)
    kp, kt = jax.random.split(root)
    params = init_params(kp, VOCAB, D, N_LAYER, D_FF)
    tokens = jax.random.randint(kt, (B, S), 0, VOCAB, dtype=jnp.int32)

    logits = llama_forward(tokens, params, N_HEAD)
    logits = jax.block_until_ready(logits)

    ref = ref_forward(tokens, params, N_HEAD)
    assert logits.shape == (B, S, VOCAB)
    assert bool(jnp.all(jnp.isfinite(logits)))
    max_err = float(jnp.max(jnp.abs(logits - ref)))
    assert bool(jnp.allclose(logits, ref, atol=3e-3, rtol=2e-2)), \
        f"mismatch vs reference (max abs err {max_err})"
    print("KERNEL_OK")
</pallas_src>

<mosaic_0001>
module attributes {stable_mosaic.version = 11 : i64} {
  func.func @llama_layers_kernel(%arg0: i32, %arg1: memref<16x32xbf16, #tpu.memory_space<vmem>>, %arg2: memref<16x32xf32, #tpu.memory_space<vmem>>, %arg3: memref<16x32xf32, #tpu.memory_space<vmem>>, %arg4: memref<16x32xf32, #tpu.memory_space<vmem>>, %arg5: memref<8x8xf32, #tpu.memory_space<vmem>>, %arg6: memref<1x1x32xf32, #tpu.memory_space<vmem>>, %arg7: memref<1x32x96xbf16, #tpu.memory_space<vmem>>, %arg8: memref<1x32x32xbf16, #tpu.memory_space<vmem>>, %arg9: memref<1x1x32xf32, #tpu.memory_space<vmem>>, %arg10: memref<1x32x128xbf16, #tpu.memory_space<vmem>>, %arg11: memref<1x64x32xbf16, #tpu.memory_space<vmem>>, %arg12: memref<1x32xf32, #tpu.memory_space<vmem>>, %arg13: memref<16x32xbf16, #tpu.memory_space<vmem>>, %arg14: memref<16x32xf32, #tpu.memory_space<vmem>>, %arg15: memref<16x96xf32, #tpu.memory_space<vmem>>, %arg16: memref<16x32xf32, #tpu.memory_space<vmem>>) attributes {dimension_semantics = [#tpu.dimension_semantics<arbitrary>], iteration_bounds = array<i64: 2>, scalar_prefetch = 0 : i64, scratch_operands = 3 : i64, tpu.core_type = #tpu.core_type<tc>, window_params = [{pipeline_mode = #tpu.pipeline_mode<synchronous>, transform_indices = @transform_0, window_bounds = array<i64: 16, 32>}, {pipeline_mode = #tpu.pipeline_mode<synchronous>, transform_indices = @transform_1, window_bounds = array<i64: 16, 32>}, {pipeline_mode = #tpu.pipeline_mode<synchronous>, transform_indices = @transform_2, window_bounds = array<i64: 16, 32>}, {pipeline_mode = #tpu.pipeline_mode<synchronous>, transform_indices = @transform_3, window_bounds = array<i64: 16, 32>}, {pipeline_mode = #tpu.pipeline_mode<synchronous>, transform_indices = @transform_4, window_bounds = array<i64: 8, 8>}, {transform_indices = @transform_5, window_bounds = array<i64: 1, 1, 32>}, {transform_indices = @transform_6, window_bounds = array<i64: 1, 32, 96>}, {transform_indices = @transform_7, window_bounds = array<i64: 1, 32, 32>}, {transform_indices = @transform_8, window_bounds = array<i64: 1, 1, 32>}, {transform_indices = @transform_9, window_bounds = array<i64: 1, 32, 128>}, {transform_indices = @transform_10, window_bounds = array<i64: 1, 64, 32>}, {pipeline_mode = #tpu.pipeline_mode<synchronous>, transform_indices = @transform_11, window_bounds = array<i64: 1, 32>}, {pipeline_mode = #tpu.pipeline_mode<synchronous>, transform_indices = @transform_12, window_bounds = array<i64: 16, 32>}]} {
    %c0_i32 = arith.constant 0 : i32
    %0 = arith.cmpi eq, %arg0, %c0_i32 : i32
    %1 = arith.extui %0 : i1 to i32
    %c0_i32_0 = arith.constant 0 : i32
    %2 = arith.cmpi ne, %1, %c0_i32_0 : i32
    scf.if %2 {
      %c0_98 = arith.constant 0 : index
      %c0_99 = arith.constant 0 : index
      %277 = vector.load %arg1[%c0_98, %c0_99] : memref<16x32xbf16, #tpu.memory_space<vmem>>, vector<16x32xbf16>
      %278 = arith.extf %277 : vector<16x32xbf16> to vector<16x32xf32>
      %c0_100 = arith.constant 0 : index
      %c0_101 = arith.constant 0 : index
      %279 = vector.load %arg14[%c0_100, %c0_101] : memref<16x32xf32, #tpu.memory_space<vmem>>, vector<16x32xf32>
      tpu.vector_store %arg14[%c0_100, %c0_101], %278 {strides = array<i32>} : memref<16x32xf32, #tpu.memory_space<vmem>>, vector<16x32xf32>,
    } else {
    }
    %c0 = arith.constant 0 : index
    %c0_1 = arith.constant 0 : index
    %3 = vector.load %arg14[%c0, %c0_1] : memref<16x32xf32, #tpu.memory_space<vmem>>, vector<16x32xf32>
    %c0_2 = arith.constant 0 : index
    %c0_3 = arith.constant 0 : index
    %4 = vector.load %arg2[%c0_2, %c0_3] : memref<16x32xf32, #tpu.memory_space<vmem>>, vector<16x32xf32>
    %c0_4 = arith.constant 0 : index
    %c0_5 = arith.constant 0 : index
    %5 = vector.load %arg3[%c0_4, %c0_5] : memref<16x32xf32, #tpu.memory_space<vmem>>, vector<16x32xf32>
    %c0_6 = arith.constant 0 : index
    %c0_7 = arith.constant 0 : index
    %6 = vector.load %arg4[%c0_6, %c0_7] : memref<16x32xf32, #tpu.memory_space<vmem>>, vector<16x32xf32>
    %c0_8 = arith.constant 0 : index
    %c0_9 = arith.constant 0 : index
    %7 = vector.load %arg5[%c0_8, %c0_9] : memref<8x8xf32, #tpu.memory_space<vmem>>, vector<8x8xf32>
    %c0_10 = arith.constant 0 : index
    %c0_11 = arith.constant 0 : index
    %c0_12 = arith.constant 0 : index
    %8 = vector.load %arg6[%c0_10, %c0_11, %c0_12] : memref<1x1x32xf32, #tpu.memory_space<vmem>>, vector<1x1x32xf32>
    %9 = vector.shape_cast %8 : vector<1x1x32xf32> to vector<1x32xf32>
    %10 = arith.mulf %3, %3 : vector<16x32xf32>
    %cst = arith.constant dense<0.000000e+00> : vector<16xf32>
    %11 = vector.multi_reduction <add>, %10, %cst [1] : vector<16x32xf32> to vector<16xf32>
    %12 = vector.shape_cast %11 : vector<16xf32> to vector<16x1xf32>
    %cst_13 = arith.constant 3.200000e+01 : f32
    %13 = vector.broadcast %cst_13 : f32 to vector<16x1xf32>
    %14 = arith.divf %12, %13 : vector<16x1xf32>
    %cst_14 = arith.constant 9.99999997E-7 : f32
    %15 = vector.broadcast %cst_14 : f32 to vector<16x1xf32>
    %16 = arith.addf %14, %15 : vector<16x1xf32>
    %17 = math.rsqrt %16 : vector<16x1xf32>
    %18 = vector.broadcast %17 : vector<16x1xf32> to vector<16x32xf32>
    %19 = arith.mulf %3, %18 : vector<16x32xf32>
    %20 = vector.broadcast %9 : vector<1x32xf32> to vector<16x32xf32>
    %21 = arith.mulf %19, %20 : vector<16x32xf32>
    %22 = arith.truncf %21 : vector<16x32xf32> to vector<16x32xbf16>
    %c0_15 = arith.constant 0 : index
    %c0_16 = arith.constant 0 : index
    %c0_17 = arith.constant 0 : index
    %23 = vector.load %arg7[%c0_15, %c0_16, %c0_17] : memref<1x32x96xbf16, #tpu.memory_space<vmem>>, vector<1x32x96xbf16>
    %24 = vector.shape_cast %23 : vector<1x32x96xbf16> to vector<32x96xbf16>
    %cst_18 = arith.constant dense<0.000000e+00> : vector<16x96xf32>
    %25 = tpu.matmul %22, %24, %cst_18 {dimension_numbers = #tpu.dot_dimension_numbers<[1], [0], [0], [1], [0, 0, 1, 1], [], []>} : vector<16x32xbf16>, vector<32x96xbf16>, vector<16x96xf32> -> vector<16x96xf32>
    %26 = vector.extract_strided_slice %25 {offsets = [0, 0], sizes = [16, 32], strides = [1, 1]} : vector<16x96xf32> to vector<16x32xf32>
    %cst_19 = arith.constant 0.353553385 : f32
    %27 = vector.broadcast %cst_19 : f32 to vector<16x32xf32>
    %28 = arith.mulf %26, %27 : vector<16x32xf32>
    %29 = vector.extract_strided_slice %28 {offsets = [0, 4], sizes = [16, 28], strides = [1, 1]} : vector<16x32xf32> to vector<16x28xf32>
    %30 = vector.extract_strided_slice %28 {offsets = [0, 0], sizes = [16, 4], strides = [1, 1]} : vector<16x32xf32> to vector<16x4xf32>
    %31 = tpu.concatenate %29, %30 in 1 : vector<16x28xf32>, vector<16x4xf32> -> vector<16x32xf32>
    %32 = vector.extract_strided_slice %28 {offsets = [0, 28], sizes = [16, 4], strides = [1, 1]} : vector<16x32xf32> to vector<16x4xf32>
    %33 = vector.extract_strided_slice %28 {offsets = [0, 0], sizes = [16, 28], strides = [1, 1]} : vector<16x32xf32> to vector<16x28xf32>
    %34 = tpu.concatenate %32, %33 in 1 : vector<16x4xf32>, vector<16x28xf32> -> vector<16x32xf32>
    %35 = arith.mulf %28, %4 : vector<16x32xf32>
    %36 = arith.mulf %31, %5 : vector<16x32xf32>
    %37 = arith.addf %35, %36 : vector<16x32xf32>
    %38 = arith.mulf %34, %6 : vector<16x32xf32>
    %39 = arith.addf %37, %38 : vector<16x32xf32>
    %c0_20 = arith.constant 0 : index
    %c0_21 = arith.constant 0 : index
    %40 = vector.load %arg15[%c0_20, %c0_21] : memref<16x96xf32, #tpu.memory_space<vmem>>, vector<16x32xf32>
    tpu.vector_store %arg15[%c0_20, %c0_21], %39 {strides = array<i32>} : memref<16x96xf32, #tpu.memory_space<vmem>>, vector<16x32xf32>,
    %41 = vector.extract_strided_slice %25 {offsets = [0, 32], sizes = [16, 32], strides = [1, 1]} : vector<16x96xf32> to vector<16x32xf32>
    %42 = vector.extract_strided_slice %41 {offsets = [0, 4], sizes = [16, 28], strides = [1, 1]} : vector<16x32xf32> to vector<16x28xf32>
    %43 = vector.extract_strided_slice %41 {offsets = [0, 0], sizes = [16, 4], strides = [1, 1]} : vector<16x32xf32> to vector<16x4xf32>
    %44 = tpu.concatenate %42, %43 in 1 : vector<16x28xf32>, vector<16x4xf32> -> vector<16x32xf32>
    %45 = vector.extract_strided_slice %41 {offsets = [0, 28], sizes = [16, 4], strides = [1, 1]} : vector<16x32xf32> to vector<16x4xf32>
    %46 = vector.extract_strided_slice %41 {offsets = [0, 0], sizes = [16, 28], strides = [1, 1]} : vector<16x32xf32> to vector<16x28xf32>
    %47 = tpu.concatenate %45, %46 in 1 : vector<16x4xf32>, vector<16x28xf32> -> vector<16x32xf32>
    %48 = arith.mulf %41, %4 : vector<16x32xf32>
    %49 = arith.mulf %44, %5 : vector<16x32xf32>
    %50 = arith.addf %48, %49 : vector<16x32xf32>
    %51 = arith.mulf %47, %6 : vector<16x32xf32>
    %52 = arith.addf %50, %51 : vector<16x32xf32>
    %c0_22 = arith.constant 0 : index
    %c32 = arith.constant 32 : index
    %53 = vector.load %arg15[%c0_22, %c32] : memref<16x96xf32, #tpu.memory_space<vmem>>, vector<16x32xf32>
    tpu.vector_store %arg15[%c0_22, %c32], %52 {strides = array<i32>} : memref<16x96xf32, #tpu.memory_space<vmem>>, vector<16x32xf32>,
    %54 = vector.extract_strided_slice %25 {offsets = [0, 64], sizes = [16, 32], strides = [1, 1]} : vector<16x96xf32> to vector<16x32xf32>
    %c0_23 = arith.constant 0 : index
    %c64 = arith.constant 64 : index
    %55 = vector.load %arg15[%c0_23, %c64] : memref<16x96xf32, #tpu.memory_space<vmem>>, vector<16x32xf32>
    tpu.vector_store %arg15[%c0_23, %c64], %54 {strides = array<i32>} : memref<16x96xf32, #tpu.memory_space<vmem>>, vector<16x32xf32>,
    %c0_24 = arith.constant 0 : index
    %c0_25 = arith.constant 0 : index
    %56 = vector.load %arg15[%c0_24, %c0_25] : memref<16x96xf32, #tpu.memory_space<vmem>>, vector<8x96xf32>
    %57 = vector.extract_strided_slice %56 {offsets = [0, 0], sizes = [8, 8], strides = [1, 1]} : vector<8x96xf32> to vector<8x8xf32>
    %58 = arith.truncf %57 : vector<8x8xf32> to vector<8x8xbf16>
    %59 = vector.extract_strided_slice %56 {offsets = [0, 32], sizes = [8, 8], strides = [1, 1]} : vector<8x96xf32> to vector<8x8xf32>
    %60 = arith.truncf %59 : vector<8x8xf32> to vector<8x8xbf16>
    %61 = vector.extract_strided_slice %56 {offsets = [0, 64], sizes = [8, 8], strides = [1, 1]} : vector<8x96xf32> to vector<8x8xf32>
    %62 = arith.truncf %61 : vector<8x8xf32> to vector<8x8xbf16>
    %63 = tpu.transpose %60, [1, 0] : vector<8x8xbf16> -> vector<8x8xbf16>
    %cst_26 = arith.constant dense<0.000000e+00> : vector<8x8xf32>
    %64 = tpu.matmul %58, %63, %cst_26 {dimension_numbers = #tpu.dot_dimension_numbers<[1], [0], [0], [1], [0, 0, 1, 1], [], []>} : vector<8x8xbf16>, vector<8x8xbf16>, vector<8x8xf32> -> vector<8x8xf32>
    %65 = arith.addf %64, %7 : vector<8x8xf32>
    %cst_27 = arith.constant dense<0xFF800000> : vector<8xf32>
    %66 = vector.multi_reduction <maximumf>, %65, %cst_27 [1] : vector<8x8xf32> to vector<8xf32>
    %67 = vector.shape_cast %66 : vector<8xf32> to vector<8x1xf32>
    %68 = vector.broadcast %67 : vector<8x1xf32> to vector<8x8xf32>
    %69 = arith.subf %65, %68 : vector<8x8xf32>
    %70 = math.exp %69 : vector<8x8xf32>
    %cst_28 = arith.constant dense<0.000000e+00> : vector<8xf32>
    %71 = vector.multi_reduction <add>, %70, %cst_28 [1] : vector<8x8xf32> to vector<8xf32>
    %72 = vector.shape_cast %71 : vector<8xf32> to vector<8x1xf32>
    %73 = tpu.reciprocal %72 {approx = true} : vector<8x1xf32> -> vector<8x1xf32>
    %74 = vector.broadcast %73 : vector<8x1xf32> to vector<8x8xf32>
    %75 = arith.mulf %70, %74 : vector<8x8xf32>
    %76 = arith.truncf %75 : vector<8x8xf32> to vector<8x8xbf16>
    %cst_29 = arith.constant dense<0.000000e+00> : vector<8x8xf32>
    %77 = tpu.matmul %76, %62, %cst_29 {dimension_numbers = #tpu.dot_dimension_numbers<[1], [0], [0], [1], [0, 0, 1, 1], [], []>} : vector<8x8xbf16>, vector<8x8xbf16>, vector<8x8xf32> -> vector<8x8xf32>
    %c0_30 = arith.constant 0 : index
    %c0_31 = arith.constant 0 : index
    %78 = vector.load %arg16[%c0_30, %c0_31] : memref<16x32xf32, #tpu.memory_space<vmem>>, vector<8x8xf32>
    tpu.vector_store %arg16[%c0_30, %c0_31], %77 {strides = array<i32>} : memref<16x32xf32, #tpu.memory_space<vmem>>, vector<8x8xf32>,
    %79 = vector.extract_strided_slice %56 {offsets = [0, 8], sizes = [8, 8], strides = [1, 1]} : vector<8x96xf32> to vector<8x8xf32>
    %80 = arith.truncf %79 : vector<8x8xf32> to vector<8x8xbf16>
    %81 = vector.extract_strided_slice %56 {offsets = [0, 40], sizes = [8, 8], strides = [1, 1]} : vector<8x96xf32> to vector<8x8xf32>
    %82 = arith.truncf %81 : vector<8x8xf32> to vector<8x8xbf16>
    %83 = vector.extract_strided_slice %56 {offsets = [0, 72], sizes = [8, 8], strides = [1, 1]} : vector<8x96xf32> to vector<8x8xf32>
    %84 = arith.truncf %83 : vector<8x8xf32> to vector<8x8xbf16>
    %85 = tpu.transpose %82, [1, 0] : vector<8x8xbf16> -> vector<8x8xbf16>
    %cst_32 = arith.constant dense<0.000000e+00> : vector<8x8xf32>
    %86 = tpu.matmul %80, %85, %cst_32 {dimension_numbers = #tpu.dot_dimension_numbers<[1], [0], [0], [1], [0, 0, 1, 1], [], []>} : vector<8x8xbf16>, vector<8x8xbf16>, vector<8x8xf32> -> vector<8x8xf32>
    %87 = arith.addf %86, %7 : vector<8x8xf32>
    %cst_33 = arith.constant dense<0xFF800000> : vector<8xf32>
    %88 = vector.multi_reduction <maximumf>, %87, %cst_33 [1] : vector<8x8xf32> to vector<8xf32>
    %89 = vector.shape_cast %88 : vector<8xf32> to vector<8x1xf32>
    %90 = vector.broadcast %89 : vector<8x1xf32> to vector<8x8xf32>
    %91 = arith.subf %87, %90 : vector<8x8xf32>
    %92 = math.exp %91 : vector<8x8xf32>
    %cst_34 = arith.constant dense<0.000000e+00> : vector<8xf32>
    %93 = vector.multi_reduction <add>, %92, %cst_34 [1] : vector<8x8xf32> to vector<8xf32>
    %94 = vector.shape_cast %93 : vector<8xf32> to vector<8x1xf32>
    %95 = tpu.reciprocal %94 {approx = true} : vector<8x1xf32> -> vector<8x1xf32>
    %96 = vector.broadcast %95 : vector<8x1xf32> to vector<8x8xf32>
    %97 = arith.mulf %92, %96 : vector<8x8xf32>
    %98 = arith.truncf %97 : vector<8x8xf32> to vector<8x8xbf16>
    %cst_35 = arith.constant dense<0.000000e+00> : vector<8x8xf32>
    %99 = tpu.matmul %98, %84, %cst_35 {dimension_numbers = #tpu.dot_dimension_numbers<[1], [0], [0], [1], [0, 0, 1, 1], [], []>} : vector<8x8xbf16>, vector<8x8xbf16>, vector<8x8xf32> -> vector<8x8xf32>
    %c0_36 = arith.constant 0 : index
    %c8 = arith.constant 8 : index
    %100 = vector.load %arg16[%c0_36, %c8] : memref<16x32xf32, #tpu.memory_space<vmem>>, vector<8x8xf32>
    tpu.vector_store %arg16[%c0_36, %c8], %99 {strides = array<i32>} : memref<16x32xf32, #tpu.memory_space<vmem>>, vector<8x8xf32>,
    %101 = vector.extract_strided_slice %56 {offsets = [0, 16], sizes = [8, 8], strides = [1, 1]} : vector<8x96xf32> to vector<8x8xf32>
    %102 = arith.truncf %101 : vector<8x8xf32> to vector<8x8xbf16>
    %103 = vector.extract_strided_slice %56 {offsets = [0, 48], sizes = [8, 8], strides = [1, 1]} : vector<8x96xf32> to vector<8x8xf32>
    %104 = arith.truncf %103 : vector<8x8xf32> to vector<8x8xbf16>
    %105 = vector.extract_strided_slice %56 {offsets = [0, 80], sizes = [8, 8], strides = [1, 1]} : vector<8x96xf32> to vector<8x8xf32>
    %106 = arith.truncf %105 : vector<8x8xf32> to vector<8x8xbf16>
    %107 = tpu.transpose %104, [1, 0] : vector<8x8xbf16> -> vector<8x8xbf16>
    %cst_37 = arith.constant dense<0.000000e+00> : vector<8x8xf32>
    %108 = tpu.matmul %102, %107, %cst_37 {dimension_numbers = #tpu.dot_dimension_numbers<[1], [0], [0], [1], [0, 0, 1, 1], [], []>} : vector<8x8xbf16>, vector<8x8xbf16>, vector<8x8xf32> -> vector<8x8xf32>
    %109 = arith.addf %108, %7 : vector<8x8xf32>
    %cst_38 = arith.constant dense<0xFF800000> : vector<8xf32>
    %110 = vector.multi_reduction <maximumf>, %109, %cst_38 [1] : vector<8x8xf32> to vector<8xf32>
    %111 = vector.shape_cast %110 : vector<8xf32> to vector<8x1xf32>
    %112 = vector.broadcast %111 : vector<8x1xf32> to vector<8x8xf32>
    %113 = arith.subf %109, %112 : vector<8x8xf32>
    %114 = math.exp %113 : vector<8x8xf32>
    %cst_39 = arith.constant dense<0.000000e+00> : vector<8xf32>
    %115 = vector.multi_reduction <add>, %114, %cst_39 [1] : vector<8x8xf32> to vector<8xf32>
    %116 = vector.shape_cast %115 : vector<8xf32> to vector<8x1xf32>
    %117 = tpu.reciprocal %116 {approx = true} : vector<8x1xf32> -> vector<8x1xf32>
    %118 = vector.broadcast %117 : vector<8x1xf32> to vector<8x8xf32>
    %119 = arith.mulf %114, %118 : vector<8x8xf32>
    %120 = arith.truncf %119 : vector<8x8xf32> to vector<8x8xbf16>
    %cst_40 = arith.constant dense<0.000000e+00> : vector<8x8xf32>
    %121 = tpu.matmul %120, %106, %cst_40 {dimension_numbers = #tpu.dot_dimension_numbers<[1], [0], [0], [1], [0, 0, 1, 1], [], []>} : vector<8x8xbf16>, vector<8x8xbf16>, vector<8x8xf32> -> vector<8x8xf32>
    %c0_41 = arith.constant 0 : index
    %c16 = arith.constant 16 : index
    %122 = vector.load %arg16[%c0_41, %c16] : memref<16x32xf32, #tpu.memory_space<vmem>>, vector<8x8xf32>
    tpu.vector_store %arg16[%c0_41, %c16], %121 {strides = array<i32>} : memref<16x32xf32, #tpu.memory_space<vmem>>, vector<8x8xf32>,
    %123 = vector.extract_strided_slice %56 {offsets = [0, 24], sizes = [8, 8], strides = [1, 1]} : vector<8x96xf32> to vector<8x8xf32>
    %124 = arith.truncf %123 : vector<8x8xf32> to vector<8x8xbf16>
    %125 = vector.extract_strided_slice %56 {offsets = [0, 56], sizes = [8, 8], strides = [1, 1]} : vector<8x96xf32> to vector<8x8xf32>
    %126 = arith.truncf %125 : vector<8x8xf32> to vector<8x8xbf16>
    %127 = vector.extract_strided_slice %56 {offsets = [0, 88], sizes = [8, 8], strides = [1, 1]} : vector<8x96xf32> to vector<8x8xf32>
    %128 = arith.truncf %127 : vector<8x8xf32> to vector<8x8xbf16>
    %129 = tpu.transpose %126, [1, 0] : vector<8x8xbf16> -> vector<8x8xbf16>
    %cst_42 = arith.constant dense<0.000000e+00> : vector<8x8xf32>
    %130 = tpu.matmul %124, %129, %cst_42 {dimension_numbers = #tpu.dot_dimension_numbers<[1], [0], [0], [1], [0, 0, 1, 1], [], []>} : vector<8x8xbf16>, vector<8x8xbf16>, vector<8x8xf32> -> vector<8x8xf32>
    %131 = arith.addf %130, %7 : vector<8x8xf32>
    %cst_43 = arith.constant dense<0xFF800000> : vector<8xf32>
    %132 = vector.multi_reduction <maximumf>, %131, %cst_43 [1] : vector<8x8xf32> to vector<8xf32>
    %133 = vector.shape_cast %132 : vector<8xf32> to vector<8x1xf32>
    %134 = vector.broadcast %133 : vector<8x1xf32> to vector<8x8xf32>
    %135 = arith.subf %131, %134 : vector<8x8xf32>
    %136 = math.exp %135 : vector<8x8xf32>
    %cst_44 = arith.constant dense<0.000000e+00> : vector<8xf32>
    %137 = vector.multi_reduction <add>, %136, %cst_44 [1] : vector<8x8xf32> to vector<8xf32>
    %138 = vector.shape_cast %137 : vector<8xf32> to vector<8x1xf32>
    %139 = tpu.reciprocal %138 {approx = true} : vector<8x1xf32> -> vector<8x1xf32>
    %140 = vector.broadcast %139 : vector<8x1xf32> to vector<8x8xf32>
    %141 = arith.mulf %136, %140 : vector<8x8xf32>
    %142 = arith.truncf %141 : vector<8x8xf32> to vector<8x8xbf16>
    %cst_45 = arith.constant dense<0.000000e+00> : vector<8x8xf32>
    %143 = tpu.matmul %142, %128, %cst_45 {dimension_numbers = #tpu.dot_dimension_numbers<[1], [0], [0], [1], [0, 0, 1, 1], [], []>} : vector<8x8xbf16>, vector<8x8xbf16>, vector<8x8xf32> -> vector<8x8xf32>
    %c0_46 = arith.constant 0 : index
    %c24 = arith.constant 24 : index
    %144 = vector.load %arg16[%c0_46, %c24] : memref<16x32xf32, #tpu.memory_space<vmem>>, vector<8x8xf32>
    tpu.vector_store %arg16[%c0_46, %c24], %143 {strides = array<i32>} : memref<16x32xf32, #tpu.memory_space<vmem>>, vector<8x8xf32>,
    %c8_47 = arith.constant 8 : index
    %c0_48 = arith.constant 0 : index
    %145 = vector.load %arg15[%c8_47, %c0_48] : memref<16x96xf32, #tpu.memory_space<vmem>>, vector<8x96xf32>
    %146 = vector.extract_strided_slice %145 {offsets = [0, 0], sizes = [8, 8], strides = [1, 1]} : vector<8x96xf32> to vector<8x8xf32>
    %147 = arith.truncf %146 : vector<8x8xf32> to vector<8x8xbf16>
    %148 = vector.extract_strided_slice %145 {offsets = [0, 32], sizes = [8, 8], strides = [1, 1]} : vector<8x96xf32> to vector<8x8xf32>
    %149 = arith.truncf %148 : vector<8x8xf32> to vector<8x8xbf16>
    %150 = vector.extract_strided_slice %145 {offsets = [0, 64], sizes = [8, 8], strides = [1, 1]} : vector<8x96xf32> to vector<8x8xf32>
    %151 = arith.truncf %150 : vector<8x8xf32> to vector<8x8xbf16>
    %152 = tpu.transpose %149, [1, 0] : vector<8x8xbf16> -> vector<8x8xbf16>
    %cst_49 = arith.constant dense<0.000000e+00> : vector<8x8xf32>
    %153 = tpu.matmul %147, %152, %cst_49 {dimension_numbers = #tpu.dot_dimension_numbers<[1], [0], [0], [1], [0, 0, 1, 1], [], []>} : vector<8x8xbf16>, vector<8x8xbf16>, vector<8x8xf32> -> vector<8x8xf32>
    %154 = arith.addf %153, %7 : vector<8x8xf32>
    %cst_50 = arith.constant dense<0xFF800000> : vector<8xf32>
    %155 = vector.multi_reduction <maximumf>, %154, %cst_50 [1] : vector<8x8xf32> to vector<8xf32>
    %156 = vector.shape_cast %155 : vector<8xf32> to vector<8x1xf32>
    %157 = vector.broadcast %156 : vector<8x1xf32> to vector<8x8xf32>
    %158 = arith.subf %154, %157 : vector<8x8xf32>
    %159 = math.exp %158 : vector<8x8xf32>
    %cst_51 = arith.constant dense<0.000000e+00> : vector<8xf32>
    %160 = vector.multi_reduction <add>, %159, %cst_51 [1] : vector<8x8xf32> to vector<8xf32>
    %161 = vector.shape_cast %160 : vector<8xf32> to vector<8x1xf32>
    %162 = tpu.reciprocal %161 {approx = true} : vector<8x1xf32> -> vector<8x1xf32>
    %163 = vector.broadcast %162 : vector<8x1xf32> to vector<8x8xf32>
    %164 = arith.mulf %159, %163 : vector<8x8xf32>
    %165 = arith.truncf %164 : vector<8x8xf32> to vector<8x8xbf16>
    %cst_52 = arith.constant dense<0.000000e+00> : vector<8x8xf32>
    %166 = tpu.matmul %165, %151, %cst_52 {dimension_numbers = #tpu.dot_dimension_numbers<[1], [0], [0], [1], [0, 0, 1, 1], [], []>} : vector<8x8xbf16>, vector<8x8xbf16>, vector<8x8xf32> -> vector<8x8xf32>
    %c8_53 = arith.constant 8 : index
    %c0_54 = arith.constant 0 : index
    %167 = vector.load %arg16[%c8_53, %c0_54] : memref<16x32xf32, #tpu.memory_space<vmem>>, vector<8x8xf32>
    tpu.vector_store %arg16[%c8_53, %c0_54], %166 {strides = array<i32>} : memref<16x32xf32, #tpu.memory_space<vmem>>, vector<8x8xf32>,
    %168 = vector.extract_strided_slice %145 {offsets = [0, 8], sizes = [8, 8], strides = [1, 1]} : vector<8x96xf32> to vector<8x8xf32>
    %169 = arith.truncf %168 : vector<8x8xf32> to vector<8x8xbf16>
    %170 = vector.extract_strided_slice %145 {offsets = [0, 40], sizes = [8, 8], strides = [1, 1]} : vector<8x96xf32> to vector<8x8xf32>
    %171 = arith.truncf %170 : vector<8x8xf32> to vector<8x8xbf16>
    %172 = vector.extract_strided_slice %145 {offsets = [0, 72], sizes = [8, 8], strides = [1, 1]} : vector<8x96xf32> to vector<8x8xf32>
    %173 = arith.truncf %172 : vector<8x8xf32> to vector<8x8xbf16>
    %174 = tpu.transpose %171, [1, 0] : vector<8x8xbf16> -> vector<8x8xbf16>
    %cst_55 = arith.constant dense<0.000000e+00> : vector<8x8xf32>
    %175 = tpu.matmul %169, %174, %cst_55 {dimension_numbers = #tpu.dot_dimension_numbers<[1], [0], [0], [1], [0, 0, 1, 1], [], []>} : vector<8x8xbf16>, vector<8x8xbf16>, vector<8x8xf32> -> vector<8x8xf32>
    %176 = arith.addf %175, %7 : vector<8x8xf32>
    %cst_56 = arith.constant dense<0xFF800000> : vector<8xf32>
    %177 = vector.multi_reduction <maximumf>, %176, %cst_56 [1] : vector<8x8xf32> to vector<8xf32>
    %178 = vector.shape_cast %177 : vector<8xf32> to vector<8x1xf32>
    %179 = vector.broadcast %178 : vector<8x1xf32> to vector<8x8xf32>
    %180 = arith.subf %176, %179 : vector<8x8xf32>
    %181 = math.exp %180 : vector<8x8xf32>
    %cst_57 = arith.constant dense<0.000000e+00> : vector<8xf32>
    %182 = vector.multi_reduction <add>, %181, %cst_57 [1] : vector<8x8xf32> to vector<8xf32>
    %183 = vector.shape_cast %182 : vector<8xf32> to vector<8x1xf32>
    %184 = tpu.reciprocal %183 {approx = true} : vector<8x1xf32> -> vector<8x1xf32>
    %185 = vector.broadcast %184 : vector<8x1xf32> to vector<8x8xf32>
    %186 = arith.mulf %181, %185 : vector<8x8xf32>
    %187 = arith.truncf %186 : vector<8x8xf32> to vector<8x8xbf16>
    %cst_58 = arith.constant dense<0.000000e+00> : vector<8x8xf32>
    %188 = tpu.matmul %187, %173, %cst_58 {dimension_numbers = #tpu.dot_dimension_numbers<[1], [0], [0], [1], [0, 0, 1, 1], [], []>} : vector<8x8xbf16>, vector<8x8xbf16>, vector<8x8xf32> -> vector<8x8xf32>
    %c8_59 = arith.constant 8 : index
    %c8_60 = arith.constant 8 : index
    %189 = vector.load %arg16[%c8_59, %c8_60] : memref<16x32xf32, #tpu.memory_space<vmem>>, vector<8x8xf32>
    tpu.vector_store %arg16[%c8_59, %c8_60], %188 {strides = array<i32>} : memref<16x32xf32, #tpu.memory_space<vmem>>, vector<8x8xf32>,
    %190 = vector.extract_strided_slice %145 {offsets = [0, 16], sizes = [8, 8], strides = [1, 1]} : vector<8x96xf32> to vector<8x8xf32>
    %191 = arith.truncf %190 : vector<8x8xf32> to vector<8x8xbf16>
    %192 = vector.extract_strided_slice %145 {offsets = [0, 48], sizes = [8, 8], strides = [1, 1]} : vector<8x96xf32> to vector<8x8xf32>
    %193 = arith.truncf %192 : vector<8x8xf32> to vector<8x8xbf16>
    %194 = vector.extract_strided_slice %145 {offsets = [0, 80], sizes = [8, 8], strides = [1, 1]} : vector<8x96xf32> to vector<8x8xf32>
    %195 = arith.truncf %194 : vector<8x8xf32> to vector<8x8xbf16>
    %196 = tpu.transpose %193, [1, 0] : vector<8x8xbf16> -> vector<8x8xbf16>
    %cst_61 = arith.constant dense<0.000000e+00> : vector<8x8xf32>
    %197 = tpu.matmul %191, %196, %cst_61 {dimension_numbers = #tpu.dot_dimension_numbers<[1], [0], [0], [1], [0, 0, 1, 1], [], []>} : vector<8x8xbf16>, vector<8x8xbf16>, vector<8x8xf32> -> vector<8x8xf32>
    %198 = arith.addf %197, %7 : vector<8x8xf32>
    %cst_62 = arith.constant dense<0xFF800000> : vector<8xf32>
    %199 = vector.multi_reduction <maximumf>, %198, %cst_62 [1] : vector<8x8xf32> to vector<8xf32>
    %200 = vector.shape_cast %199 : vector<8xf32> to vector<8x1xf32>
    %201 = vector.broadcast %200 : vector<8x1xf32> to vector<8x8xf32>
    %202 = arith.subf %198, %201 : vector<8x8xf32>
    %203 = math.exp %202 : vector<8x8xf32>
    %cst_63 = arith.constant dense<0.000000e+00> : vector<8xf32>
    %204 = vector.multi_reduction <add>, %203, %cst_63 [1] : vector<8x8xf32> to vector<8xf32>
    %205 = vector.shape_cast %204 : vector<8xf32> to vector<8x1xf32>
    %206 = tpu.reciprocal %205 {approx = true} : vector<8x1xf32> -> vector<8x1xf32>
    %207 = vector.broadcast %206 : vector<8x1xf32> to vector<8x8xf32>
    %208 = arith.mulf %203, %207 : vector<8x8xf32>
    %209 = arith.truncf %208 : vector<8x8xf32> to vector<8x8xbf16>
    %cst_64 = arith.constant dense<0.000000e+00> : vector<8x8xf32>
    %210 = tpu.matmul %209, %195, %cst_64 {dimension_numbers = #tpu.dot_dimension_numbers<[1], [0], [0], [1], [0, 0, 1, 1], [], []>} : vector<8x8xbf16>, vector<8x8xbf16>, vector<8x8xf32> -> vector<8x8xf32>
    %c8_65 = arith.constant 8 : index
    %c16_66 = arith.constant 16 : index
    %211 = vector.load %arg16[%c8_65, %c16_66] : memref<16x32xf32, #tpu.memory_space<vmem>>, vector<8x8xf32>
    tpu.vector_store %arg16[%c8_65, %c16_66], %210 {strides = array<i32>} : memref<16x32xf32, #tpu.memory_space<vmem>>, vector<8x8xf32>,
    %212 = vector.extract_strided_slice %145 {offsets = [0, 24], sizes = [8, 8], strides = [1, 1]} : vector<8x96xf32> to vector<8x8xf32>
    %213 = arith.truncf %212 : vector<8x8xf32> to vector<8x8xbf16>
    %214 = vector.extract_strided_slice %145 {offsets = [0, 56], sizes = [8, 8], strides = [1, 1]} : vector<8x96xf32> to vector<8x8xf32>
    %215 = arith.truncf %214 : vector<8x8xf32> to vector<8x8xbf16>
    %216 = vector.extract_strided_slice %145 {offsets = [0, 88], sizes = [8, 8], strides = [1, 1]} : vector<8x96xf32> to vector<8x8xf32>
    %217 = arith.truncf %216 : vector<8x8xf32> to vector<8x8xbf16>
    %218 = tpu.transpose %215, [1, 0] : vector<8x8xbf16> -> vector<8x8xbf16>
    %cst_67 = arith.constant dense<0.000000e+00> : vector<8x8xf32>
    %219 = tpu.matmul %213, %218, %cst_67 {dimension_numbers = #tpu.dot_dimension_numbers<[1], [0], [0], [1], [0, 0, 1, 1], [], []>} : vector<8x8xbf16>, vector<8x8xbf16>, vector<8x8xf32> -> vector<8x8xf32>
    %220 = arith.addf %219, %7 : vector<8x8xf32>
    %cst_68 = arith.constant dense<0xFF800000> : vector<8xf32>
    %221 = vector.multi_reduction <maximumf>, %220, %cst_68 [1] : vector<8x8xf32> to vector<8xf32>
    %222 = vector.shape_cast %221 : vector<8xf32> to vector<8x1xf32>
    %223 = vector.broadcast %222 : vector<8x1xf32> to vector<8x8xf32>
    %224 = arith.subf %220, %223 : vector<8x8xf32>
    %225 = math.exp %224 : vector<8x8xf32>
    %cst_69 = arith.constant dense<0.000000e+00> : vector<8xf32>
    %226 = vector.multi_reduction <add>, %225, %cst_69 [1] : vector<8x8xf32> to vector<8xf32>
    %227 = vector.shape_cast %226 : vector<8xf32> to vector<8x1xf32>
    %228 = tpu.reciprocal %227 {approx = true} : vector<8x1xf32> -> vector<8x1xf32>
    %229 = vector.broadcast %228 : vector<8x1xf32> to vector<8x8xf32>
    %230 = arith.mulf %225, %229 : vector<8x8xf32>
    %231 = arith.truncf %230 : vector<8x8xf32> to vector<8x8xbf16>
    %cst_70 = arith.constant dense<0.000000e+00> : vector<8x8xf32>
    %232 = tpu.matmul %231, %217, %cst_70 {dimension_numbers = #tpu.dot_dimension_numbers<[1], [0], [0], [1], [0, 0, 1, 1], [], []>} : vector<8x8xbf16>, vector<8x8xbf16>, vector<8x8xf32> -> vector<8x8xf32>
    %c8_71 = arith.constant 8 : index
    %c24_72 = arith.constant 24 : index
    %233 = vector.load %arg16[%c8_71, %c24_72] : memref<16x32xf32, #tpu.memory_space<vmem>>, vector<8x8xf32>
    tpu.vector_store %arg16[%c8_71, %c24_72], %232 {strides = array<i32>} : memref<16x32xf32, #tpu.memory_space<vmem>>, vector<8x8xf32>,
    %c0_73 = arith.constant 0 : index
    %c0_74 = arith.constant 0 : index
    %234 = vector.load %arg16[%c0_73, %c0_74] : memref<16x32xf32, #tpu.memory_space<vmem>>, vector<16x32xf32>
    %235 = arith.truncf %234 : vector<16x32xf32> to vector<16x32xbf16>
    %c0_75 = arith.constant 0 : index
    %c0_76 = arith.constant 0 : index
    %c0_77 = arith.constant 0 : index
    %236 = vector.load %arg8[%c0_75, %c0_76, %c0_77] : memref<1x32x32xbf16, #tpu.memory_space<vmem>>, vector<1x32x32xbf16>
    %237 = vector.shape_cast %236 : vector<1x32x32xbf16> to vector<32x32xbf16>
    %cst_78 = arith.constant dense<0.000000e+00> : vector<16x32xf32>
    %238 = tpu.matmul %235, %237, %cst_78 {dimension_numbers = #tpu.dot_dimension_numbers<[1], [0], [0], [1], [0, 0, 1, 1], [], []>} : vector<16x32xbf16>, vector<32x32xbf16>, vector<16x32xf32> -> vector<16x32xf32>
    %239 = arith.addf %3, %238 : vector<16x32xf32>
    %c0_79 = arith.constant 0 : index
    %c0_80 = arith.constant 0 : index
    %c0_81 = arith.constant 0 : index
    %240 = vector.load %arg9[%c0_79, %c0_80, %c0_81] : memref<1x1x32xf32, #tpu.memory_space<vmem>>, vector<1x1x32xf32>
    %241 = vector.shape_cast %240 : vector<1x1x32xf32> to vector<1x32xf32>
    %242 = arith.mulf %239, %239 : vector<16x32xf32>
    %cst_82 = arith.constant dense<0.000000e+00> : vector<16xf32>
    %243 = vector.multi_reduction <add>, %242, %cst_82 [1] : vector<16x32xf32> to vector<16xf32>
    %244 = vector.shape_cast %243 : vector<16xf32> to vector<16x1xf32>
    %cst_83 = arith.constant 3.200000e+01 : f32
    %245 = vector.broadcast %cst_83 : f32 to vector<16x1xf32>
    %246 = arith.divf %244, %245 : vector<16x1xf32>
    %cst_84 = arith.constant 9.99999997E-7 : f32
    %247 = vector.broadcast %cst_84 : f32 to vector<16x1xf32>
    %248 = arith.addf %246, %247 : vector<16x1xf32>
    %249 = math.rsqrt %248 : vector<16x1xf32>
    %250 = vector.broadcast %249 : vector<16x1xf32> to vector<16x32xf32>
    %251 = arith.mulf %239, %250 : vector<16x32xf32>
    %252 = vector.broadcast %241 : vector<1x32xf32> to vector<16x32xf32>
    %253 = arith.mulf %251, %252 : vector<16x32xf32>
    %254 = arith.truncf %253 : vector<16x32xf32> to vector<16x32xbf16>
    %c0_85 = arith.constant 0 : index
    %c0_86 = arith.constant 0 : index
    %c0_87 = arith.constant 0 : index
    %255 = vector.load %arg10[%c0_85, %c0_86, %c0_87] : memref<1x32x128xbf16, #tpu.memory_space<vmem>>, vector<1x32x128xbf16>
    %256 = vector.shape_cast %255 : vector<1x32x128xbf16> to vector<32x128xbf16>
    %cst_88 = arith.constant dense<0.000000e+00> : vector<16x128xf32>
    %257 = tpu.matmul %254, %256, %cst_88 {dimension_numbers = #tpu.dot_dimension_numbers<[1], [0], [0], [1], [0, 0, 1, 1], [], []>} : vector<16x32xbf16>, vector<32x128xbf16>, vector<16x128xf32> -> vector<16x128xf32>
    %258 = vector.extract_strided_slice %257 {offsets = [0, 0], sizes = [16, 64], strides = [1, 1]} : vector<16x128xf32> to vector<16x64xf32>
    %259 = vector.extract_strided_slice %257 {offsets = [0, 64], sizes = [16, 64], strides = [1, 1]} : vector<16x128xf32> to vector<16x64xf32>
    %cst_89 = arith.constant 0.000000e+00 : f32
    %260 = vector.broadcast %cst_89 : f32 to vector<16x64xf32>
    %261 = arith.subf %260, %258 : vector<16x64xf32>
    %262 = math.exp %261 : vector<16x64xf32>
    %cst_90 = arith.constant 1.000000e+00 : f32
    %263 = vector.broadcast %cst_90 : f32 to vector<16x64xf32>
    %264 = arith.addf %263, %262 : vector<16x64xf32>
    %265 = tpu.reciprocal %264 {approx = true} : vector<16x64xf32> -> vector<16x64xf32>
    %266 = arith.mulf %258, %265 : vector<16x64xf32>
    %267 = arith.mulf %266, %259 : vector<16x64xf32>
    %268 = arith.truncf %267 : vector<16x64xf32> to vector<16x64xbf16>
    %c0_91 = arith.constant 0 : index
    %c0_92 = arith.constant 0 : index
    %c0_93 = arith.constant 0 : index
    %269 = vector.load %arg11[%c0_91, %c0_92, %c0_93] : memref<1x64x32xbf16, #tpu.memory_space<vmem>>, vector<1x64x32xbf16>
    %270 = vector.shape_cast %269 : vector<1x64x32xbf16> to vector<64x32xbf16>
    %cst_94 = arith.constant dense<0.000000e+00> : vector<16x32xf32>
    %271 = tpu.matmul %268, %270, %cst_94 {dimension_numbers = #tpu.dot_dimension_numbers<[1], [0], [0], [1], [0, 0, 1, 1], [], []>} : vector<16x64xbf16>, vector<64x32xbf16>, vector<16x32xf32> -> vector<16x32xf32>
    %272 = arith.addf %239, %271 : vector<16x32xf32>
    %c0_95 = arith.constant 0 : index
    %c0_96 = arith.constant 0 : index
    %273 = vector.load %arg14[%c0_95, %c0_96] : memref<16x32xf32, #tpu.memory_space<vmem>>, vector<16x32xf32>
    tpu.vector_store %arg14[%c0_95, %c0_96], %272 {strides = array<i32>} : memref<16x32xf32, #tpu.memory_space<vmem>>, vector<16x32xf32>,
    %c1_i32 = arith.constant 1 : i32
    %274 = arith.cmpi eq, %arg0, %c1_i32 : i32
    %275 = arith.extui %274 : i1 to i32
    %c0_i32_97 = arith.constant 0 : i32
    %276 = arith.cmpi ne, %275, %c0_i32_97 : i32
    scf.if %276 {
      %c0_98 = arith.constant 0 : index
      %c0_99 = arith.constant 0 : index
      %277 = vector.load %arg12[%c0_98, %c0_99] : memref<1x32xf32, #tpu.memory_space<vmem>>, vector<1x32xf32>
      %278 = arith.mulf %272, %272 : vector<16x32xf32>
      %cst_100 = arith.constant dense<0.000000e+00> : vector<16xf32>
      %279 = vector.multi_reduction <add>, %278, %cst_100 [1] : vector<16x32xf32> to vector<16xf32>
      %280 = vector.shape_cast %279 : vector<16xf32> to vector<16x1xf32>
      %cst_101 = arith.constant 3.200000e+01 : f32
      %281 = vector.broadcast %cst_101 : f32 to vector<16x1xf32>
      %282 = arith.divf %280, %281 : vector<16x1xf32>
      %cst_102 = arith.constant 9.99999997E-7 : f32
      %283 = vector.broadcast %cst_102 : f32 to vector<16x1xf32>
      %284 = arith.addf %282, %283 : vector<16x1xf32>
      %285 = math.rsqrt %284 : vector<16x1xf32>
      %286 = vector.broadcast %285 : vector<16x1xf32> to vector<16x32xf32>
      %287 = arith.mulf %272, %286 : vector<16x32xf32>
      %288 = vector.broadcast %277 : vector<1x32xf32> to vector<16x32xf32>
      %289 = arith.mulf %287, %288 : vector<16x32xf32>
      %290 = arith.truncf %289 : vector<16x32xf32> to vector<16x32xbf16>
      %c0_103 = arith.constant 0 : index
      %c0_104 = arith.constant 0 : index
      %291 = vector.load %arg13[%c0_103, %c0_104] : memref<16x32xbf16, #tpu.memory_space<vmem>>, vector<16x32xbf16>
      tpu.vector_store %arg13[%c0_103, %c0_104], %290 {strides = array<i32>} : memref<16x32xbf16, #tpu.memory_space<vmem>>, vector<16x32xbf16>,
    } else {
    }
    return
  }
  func.func @transform_0(%arg0: i32) -> (i32, i32) {
    %c0_i32 = arith.constant 0 : i32
    %c0_i32_0 = arith.constant 0 : i32
    %c0_i32_1 = arith.constant 0 : i32
    return %c0_i32, %c0_i32_0 : i32, i32
  }
  func.func @transform_1(%arg0: i32) -> (i32, i32) {
    %c0_i32 = arith.constant 0 : i32
    %c0_i32_0 = arith.constant 0 : i32
    %c0_i32_1 = arith.constant 0 : i32
    return %c0_i32, %c0_i32_0 : i32, i32
  }
  func.func @transform_2(%arg0: i32) -> (i32, i32) {
    %c0_i32 = arith.constant 0 : i32
    %c0_i32_0 = arith.constant 0 : i32
    %c0_i32_1 = arith.constant 0 : i32
    return %c0_i32, %c0_i32_0 : i32, i32
  }
  func.func @transform_3(%arg0: i32) -> (i32, i32) {
    %c0_i32 = arith.constant 0 : i32
    %c0_i32_0 = arith.constant 0 : i32
    %c0_i32_1 = arith.constant 0 : i32
    return %c0_i32, %c0_i32_0 : i32, i32
  }
  func.func @transform_4(%arg0: i32) -> (i32, i32) {
    %c0_i32 = arith.constant 0 : i32
    %c0_i32_0 = arith.constant 0 : i32
    %c0_i32_1 = arith.constant 0 : i32
    return %c0_i32, %c0_i32_0 : i32, i32
  }
  func.func @transform_5(%arg0: i32) -> (i32, i32, i32) {
    %c0_i32 = arith.constant 0 : i32
    %c0_i32_0 = arith.constant 0 : i32
    %c0_i32_1 = arith.constant 0 : i32
    return %arg0, %c0_i32, %c0_i32_0 : i32, i32, i32
  }
  func.func @transform_6(%arg0: i32) -> (i32, i32, i32) {
    %c0_i32 = arith.constant 0 : i32
    %c0_i32_0 = arith.constant 0 : i32
    %c0_i32_1 = arith.constant 0 : i32
    return %arg0, %c0_i32, %c0_i32_0 : i32, i32, i32
  }
  func.func @transform_7(%arg0: i32) -> (i32, i32, i32) {
    %c0_i32 = arith.constant 0 : i32
    %c0_i32_0 = arith.constant 0 : i32
    %c0_i32_1 = arith.constant 0 : i32
    return %arg0, %c0_i32, %c0_i32_0 : i32, i32, i32
  }
  func.func @transform_8(%arg0: i32) -> (i32, i32, i32) {
    %c0_i32 = arith.constant 0 : i32
    %c0_i32_0 = arith.constant 0 : i32
    %c0_i32_1 = arith.constant 0 : i32
    return %arg0, %c0_i32, %c0_i32_0 : i32, i32, i32
  }
  func.func @transform_9(%arg0: i32) -> (i32, i32, i32) {
    %c0_i32 = arith.constant 0 : i32
    %c0_i32_0 = arith.constant 0 : i32
    %c0_i32_1 = arith.constant 0 : i32
    return %arg0, %c0_i32, %c0_i32_0 : i32, i32, i32
  }
  func.func @transform_10(%arg0: i32) -> (i32, i32, i32) {
    %c0_i32 = arith.constant 0 : i32
    %c0_i32_0 = arith.constant 0 : i32
    %c0_i32_1 = arith.constant 0 : i32
    return %arg0, %c0_i32, %c0_i32_0 : i32, i32, i32
  }
  func.func @transform_11(%arg0: i32) -> (i32, i32) {
    %c0_i32 = arith.constant 0 : i32
    %c0_i32_0 = arith.constant 0 : i32
    %c0_i32_1 = arith.constant 0 : i32
    return %c0_i32, %c0_i32_0 : i32, i32
  }
  func.func @transform_12(%arg0: i32) -> (i32, i32) {
    %c0_i32 = arith.constant 0 : i32
    %c0_i32_0 = arith.constant 0 : i32
    %c0_i32_1 = arith.constant 0 : i32
    return %c0_i32, %c0_i32_0 : i32, i32
  }
}

</mosaic_0001>

<llo_original>
// kernel: tpu_custom_call.1
$region0: #{tpu_custom_call.1}
  #allocation0 [shape = 'u32[]', space=smem, size = 0x4, offset = 0x4, fixed_abs, tag = 'smem constant byte address 0x4 - core index']
  #allocation1 [shape = 'u32[72,128]{1,0:T(1,128)}', space=vmem, size = 0x9000, scoped, tag = 'internal scratch']
  #allocation2 [shape = 'f32[16,32]{1,0:T(8,128)}', space=vmem, size = 0x2000, scoped, tag = 'scratch operand']
  #allocation3 [shape = 'f32[16,96]{1,0:T(8,128)}', space=vmem, size = 0x2000, scoped, tag = 'scratch operand']
  #allocation4 [shape = 'f32[16,32]{1,0:T(8,128)}', space=vmem, size = 0x2000, scoped, tag = 'scratch operand']
  %s0 = inlined_call_operand.hbm [shape: bf16[16,32], index: 0, kind: input, shape index: {}]
  %s1 = inlined_call_operand.hbm [shape: f32[16,32], index: 1, kind: input, shape index: {}]
  %s2 = inlined_call_operand.hbm [shape: f32[16,32], index: 2, kind: input, shape index: {}]
  %s3 = inlined_call_operand.hbm [shape: f32[16,32], index: 3, kind: input, shape index: {}]
  %s4 = inlined_call_operand.hbm [shape: f32[8,8], index: 4, kind: input, shape index: {}]
  %s5 = inlined_call_operand.vmem [shape: f32[2,1,32], index: 5, kind: input, shape index: {}]
  %s6 = inlined_call_operand.vmem [shape: bf16[2,32,96], index: 6, kind: input, shape index: {}]
  %s7 = inlined_call_operand.vmem [shape: bf16[2,32,32], index: 7, kind: input, shape index: {}]
  %s8 = inlined_call_operand.vmem [shape: f32[2,1,32], index: 8, kind: input, shape index: {}]
  %s9 = inlined_call_operand.vmem [shape: bf16[2,32,128], index: 9, kind: input, shape index: {}]
  %s10 = inlined_call_operand.vmem [shape: bf16[2,64,32], index: 10, kind: input, shape index: {}]
  %s11 = inlined_call_operand.vmem [shape: f32[1,32], index: 11, kind: input, shape index: {}]
  %s12 = inlined_call_operand.hbm [shape: bf16[16,32], index: 12, kind: output, shape index: {}]
  %s13 = sld [smem:[#allocation0]]
  $region109: #{tpu_custom_call.1} parent=0
    _
  %s15 = ssub.s32 1, %s13
  %s16 = scalar_select 0, %s15, %s13
  $region1: #{tpu_custom_call.1} parent=0
    #allocation5 [shape = 'u8[4096]{0}', space=vmem, size = 0x1000, scoped, tag = 'input window, operand 0, single buffered']
    #allocation6 [shape = 's32[2]{0}', space=sflag, size = 0x8, scoped, tag = 'scoped memory for tpu_custom_call.1']
    #allocation7 [shape = 's32[2]{0}', space=sflag, size = 0x8, scoped, tag = 'scoped memory for tpu_custom_call.1']
    #allocation8 [shape = 'u8[8192]{0}', space=vmem, size = 0x2000, scoped, tag = 'input window, operand 1, single buffered']
    #allocation9 [shape = 's32[1]{0}', space=sflag, size = 0x4, scoped, tag = 'scoped memory for tpu_custom_call.1']
    #allocation10 [shape = 'u8[8192]{0}', space=vmem, size = 0x2000, scoped, tag = 'input window, operand 2, single buffered']
    #allocation11 [shape = 'u8[8192]{0}', space=vmem, size = 0x2000, scoped, tag = 'input window, operand 3, single buffered']
    #allocation12 [shape = 's32[1]{0}', space=sflag, size = 0x4, scoped, tag = 'scoped memory for tpu_custom_call.1']
    #allocation13 [shape = 'u8[4096]{0}', space=vmem, size = 0x1000, scoped, tag = 'input window, operand 4, single buffered']
    #allocation14 [shape = 'u8[4096]{0}', space=vmem, size = 0x1000, scoped, tag = 'output window, operand 0, single buffered']
    %17 = vsyncpa [#allocation6], 0
    %18 = vsyncpa [#allocation9], 0
    %19 = vsyncpa [#allocation12], 0
    %20 = vsyncpa [#allocation7], 0
    loop: start=0, step=1, limit=4
    $region2: #{tpu_custom_call.1} parent=1 // loop_pre_header
      _
    $region3: #{tpu_custom_call.1} parent=1 // loop_header
      %s22 = sphi 0, %s26
      %p23 = scmp.ge.s32.totalorder %s22, 4
      %s30 = sphi 0, %s30
      %s32 = sphi 0, %s30
      %s33 = sphi 0, %s32
      %s47 = sphi 0, %s33
      %s51 = sphi 0, %s51
      %s53 = sphi 0, %s51
      %s54 = sphi 0, %s53
      %s68 = sphi 0, %s54
      %s72 = sphi 0, %s72
      %s74 = sphi 0, %s72
      %s75 = sphi 0, %s74
      %s89 = sphi 0, %s75
      %s93 = sphi 0, %s93
      %s95 = sphi 0, %s93
      %s96 = sphi 0, %s95
      %s110 = sphi 0, %s96
      %s114 = sphi 0, %s114
      %s116 = sphi 0, %s114
      %s117 = sphi 0, %s116
      %s131 = sphi 0, %s117
      %s137 = sphi 0, %s139
      %s140 = sphi 0, %s137
      %s141 = sphi 0, %s140
      %s157 = sphi 0, %s141
      %s163 = sphi 0, %s165
      %s166 = sphi 0, %s163
      %s167 = sphi 0, %s166
      %s183 = sphi 0, %s167
      %s189 = sphi 0, %s191
      %s192 = sphi 0, %s189
      %s193 = sphi 0, %s192
      %s209 = sphi 0, %s193
      %s215 = sphi 0, %s217
      %s218 = sphi 0, %s215
      %s219 = sphi 0, %s218
      %s235 = sphi 0, %s219
      %s241 = sphi 0, %s243
      %s244 = sphi 0, %s241
      %s245 = sphi 0, %s244
      %s261 = sphi 0, %s245
      %s267 = sphi 0, %s269
      %s270 = sphi 0, %s267
      %s271 = sphi 0, %s270
      %s287 = sphi 0, %s271
      %s291 = sphi 0, %s291
      %s293 = sphi 0, %s291
      %s294 = sphi 0, %s293
      %s308 = sphi 0, %s294
      %s312 = sphi 0, %s312
      %s314 = sphi 0, %s312
      %s315 = sphi 0, %s314
      %s329 = sphi 0, %s315
    $region4: #{tpu_custom_call.1} parent=1 // loop_header_branch
      %25 = sbr.rel (%p23) target = $region8
    $region5: #{tpu_custom_call.1} parent=1 // loop_body
      %s27 = ssub.s32 %s22, 1
      %s28 = ssub.s32 %s22, 2
      %s29 = sadd.s32 %s22, 1
      %s31 = sadd.s32 %s30, 1
      %p34 = scmp.eq.s32.totalorder %s22, 1
      %p35 = scmp.ne.s32.totalorder %s30, %s32
      %p36 = scmp.eq.s32.totalorder %s22, 0
      %p37 = por %p35, %p36
      %p38 = scmp.ne.s32.totalorder %s30, %s32
      %p39 = scmp.eq.s32.totalorder %s27, 1
      %p40 = por %p38, %p39
      %p41 = scmp.ne.s32.totalorder %s32, %s33
      %p42 = scmp.eq.s32.totalorder %s27, 0
      %p43 = por %p41, %p42
      %p44 = scmp.ne.s32.totalorder %s32, %s33
      %p45 = scmp.eq.s32.totalorder %s28, 1
      %p46 = por %p44, %p45
      %p48 = scmp.ne.s32.totalorder %s33, %s47
      %p49 = scmp.eq.s32.totalorder %s28, 0
      %p50 = por %p48, %p49
      %s52 = sadd.s32 %s51, 1
      %p55 = scmp.eq.s32.totalorder %s22, 1
      %p56 = scmp.ne.s32.totalorder %s51, %s53
      %p57 = scmp.eq.s32.totalorder %s22, 0
      %p58 = por %p56, %p57
      %p59 = scmp.ne.s32.totalorder %s51, %s53
      %p60 = scmp.eq.s32.totalorder %s27, 1
      %p61 = por %p59, %p60
      %p62 = scmp.ne.s32.totalorder %s53, %s54
      %p63 = scmp.eq.s32.totalorder %s27, 0
      %p64 = por %p62, %p63
      %p65 = scmp.ne.s32.totalorder %s53, %s54
      %p66 = scmp.eq.s32.totalorder %s28, 1
      %p67 = por %p65, %p66
      %p69 = scmp.ne.s32.totalorder %s54, %s68
      %p70 = scmp.eq.s32.totalorder %s28, 0
      %p71 = por %p69, %p70
      %s73 = sadd.s32 %s72, 1
      %p76 = scmp.eq.s32.totalorder %s22, 1
      %p77 = scmp.ne.s32.totalorder %s72, %s74
      %p78 = scmp.eq.s32.totalorder %s22, 0
      %p79 = por %p77, %p78
      %p80 = scmp.ne.s32.totalorder %s72, %s74
      %p81 = scmp.eq.s32.totalorder %s27, 1
      %p82 = por %p80, %p81
      %p83 = scmp.ne.s32.totalorder %s74, %s75
      %p84 = scmp.eq.s32.totalorder %s27, 0
      %p85 = por %p83, %p84
      %p86 = scmp.ne.s32.totalorder %s74, %s75
      %p87 = scmp.eq.s32.totalorder %s28, 1
      %p88 = por %p86, %p87
      %p90 = scmp.ne.s32.totalorder %s75, %s89
      %p91 = scmp.eq.s32.totalorder %s28, 0
      %p92 = por %p90, %p91
      %s94 = sadd.s32 %s93, 1
      %p97 = scmp.eq.s32.totalorder %s22, 1
      %p98 = scmp.ne.s32.totalorder %s93, %s95
      %p99 = scmp.eq.s32.totalorder %s22, 0
      %p100 = por %p98, %p99
      %p101 = scmp.ne.s32.totalorder %s93, %s95
      %p102 = scmp.eq.s32.totalorder %s27, 1
      %p103 = por %p101, %p102
      %p104 = scmp.ne.s32.totalorder %s95, %s96
      %p105 = scmp.eq.s32.totalorder %s27, 0
      %p106 = por %p104, %p105
      %p107 = scmp.ne.s32.totalorder %s95, %s96
      %p108 = scmp.eq.s32.totalorder %s28, 1
      %p109 = por %p107, %p108
      %p111 = scmp.ne.s32.totalorder %s96, %s110
      %p112 = scmp.eq.s32.totalorder %s28, 0
      %p113 = por %p111, %p112
      %s115 = sadd.s32 %s114, 1
      %p118 = scmp.eq.s32.totalorder %s22, 1
      %p119 = scmp.ne.s32.totalorder %s114, %s116
      %p120 = scmp.eq.s32.totalorder %s22, 0
      %p121 = por %p119, %p120
      %p122 = scmp.ne.s32.totalorder %s114, %s116
      %p123 = scmp.eq.s32.totalorder %s27, 1
      %p124 = por %p122, %p123
      %p125 = scmp.ne.s32.totalorder %s116, %s117
      %p126 = scmp.eq.s32.totalorder %s27, 0
      %p127 = por %p125, %p126
      %p128 = scmp.ne.s32.totalorder %s116, %s117
      %p129 = scmp.eq.s32.totalorder %s28, 1
      %p130 = por %p128, %p129
      %p132 = scmp.ne.s32.totalorder %s117, %s131
      %p133 = scmp.eq.s32.totalorder %s28, 0
      %p134 = por %p132, %p133
      %s135 = ssub.s32 %s22, %s29
      %p136 = scmp.eq.s32.totalorder %s135, 0
      %s138 = sadd.s32 %s137, 1
      %s139 = scalar_select %p136, %s137, %s138
      %p142 = pneg %p136
      %p143 = scmp.eq.s32.totalorder %s22, 1
      %p144 = por %p142, %p143
      %p145 = scmp.ne.s32.totalorder %s137, %s140
      %p146 = scmp.eq.s32.totalorder %s22, 0
      %p147 = por %p145, %p146
      %p148 = scmp.ne.s32.totalorder %s137, %s140
      %p149 = scmp.eq.s32.totalorder %s27, 1
      %p150 = por %p148, %p149
      %p151 = scmp.ne.s32.totalorder %s140, %s141
      %p152 = scmp.eq.s32.totalorder %s27, 0
      %p153 = por %p151, %p152
      %p154 = scmp.ne.s32.totalorder %s140, %s141
      %p155 = scmp.eq.s32.totalorder %s28, 1
      %p156 = por %p154, %p155
      %p158 = scmp.ne.s32.totalorder %s141, %s157
      %p159 = scmp.eq.s32.totalorder %s28, 0
      %p160 = por %p158, %p159
      %s161 = ssub.s32 %s22, %s29
      %p162 = scmp.eq.s32.totalorder %s161, 0
      %s164 = sadd.s32 %s163, 1
      %s165 = scalar_select %p162, %s163, %s164
      %p168 = pneg %p162
      %p169 = scmp.eq.s32.totalorder %s22, 1
      %p170 = por %p168, %p169
      %p171 = scmp.ne.s32.totalorder %s163, %s166
      %p172 = scmp.eq.s32.totalorder %s22, 0
      %p173 = por %p171, %p172
      %p174 = scmp.ne.s32.totalorder %s163, %s166
      %p175 = scmp.eq.s32.totalorder %s27, 1
      %p176 = por %p174, %p175
      %p177 = scmp.ne.s32.totalorder %s166, %s167
      %p178 = scmp.eq.s32.totalorder %s27, 0
      %p179 = por %p177, %p178
      %p180 = scmp.ne.s32.totalorder %s166, %s167
      %p181 = scmp.eq.s32.totalorder %s28, 1
      %p182 = por %p180, %p181
      %p184 = scmp.ne.s32.totalorder %s167, %s183
      %p185 = scmp.eq.s32.totalorder %s28, 0
      %p186 = por %p184, %p185
      %s187 = ssub.s32 %s22, %s29
      %p188 = scmp.eq.s32.totalorder %s187, 0
      %s190 = sadd.s32 %s189, 1
      %s191 = scalar_select %p188, %s189, %s190
      %p194 = pneg %p188
      %p195 = scmp.eq.s32.totalorder %s22, 1
      %p196 = por %p194, %p195
      %p197 = scmp.ne.s32.totalorder %s189, %s192
      %p198 = scmp.eq.s32.totalorder %s22, 0
      %p199 = por %p197, %p198
      %p200 = scmp.ne.s32.totalorder %s189, %s192
      %p201 = scmp.eq.s32.totalorder %s27, 1
      %p202 = por %p200, %p201
      %p203 = scmp.ne.s32.totalorder %s192, %s193
      %p204 = scmp.eq.s32.totalorder %s27, 0
      %p205 = por %p203, %p204
      %p206 = scmp.ne.s32.totalorder %s192, %s193
      %p207 = scmp.eq.s32.totalorder %s28, 1
      %p208 = por %p206, %p207
      %p210 = scmp.ne.s32.totalorder %s193, %s209
      %p211 = scmp.eq.s32.totalorder %s28, 0
      %p212 = por %p210, %p211
      %s213 = ssub.s32 %s22, %s29
      %p214 = scmp.eq.s32.totalorder %s213, 0
      %s216 = sadd.s32 %s215, 1
      %s217 = scalar_select %p214, %s215, %s216
      %p220 = pneg %p214
      %p221 = scmp.eq.s32.totalorder %s22, 1
      %p222 = por %p220, %p221
      %p223 = scmp.ne.s32.totalorder %s215, %s218
      %p224 = scmp.eq.s32.totalorder %s22, 0
      %p225 = por %p223, %p224
      %p226 = scmp.ne.s32.totalorder %s215, %s218
      %p227 = scmp.eq.s32.totalorder %s27, 1
      %p228 = por %p226, %p227
      %p229 = scmp.ne.s32.totalorder %s218, %s219
      %p230 = scmp.eq.s32.totalorder %s27, 0
      %p231 = por %p229, %p230
      %p232 = scmp.ne.s32.totalorder %s218, %s219
      %p233 = scmp.eq.s32.totalorder %s28, 1
      %p234 = por %p232, %p233
      %p236 = scmp.ne.s32.totalorder %s219, %s235
      %p237 = scmp.eq.s32.totalorder %s28, 0
      %p238 = por %p236, %p237
      %s239 = ssub.s32 %s22, %s29
      %p240 = scmp.eq.s32.totalorder %s239, 0
      %s242 = sadd.s32 %s241, 1
      %s243 = scalar_select %p240, %s241, %s242
      %p246 = pneg %p240
      %p247 = scmp.eq.s32.totalorder %s22, 1
      %p248 = por %p246, %p247
      %p249 = scmp.ne.s32.totalorder %s241, %s244
      %p250 = scmp.eq.s32.totalorder %s22, 0
      %p251 = por %p249, %p250
      %p252 = scmp.ne.s32.totalorder %s241, %s244
      %p253 = scmp.eq.s32.totalorder %s27, 1
      %p254 = por %p252, %p253
      %p255 = scmp.ne.s32.totalorder %s244, %s245
      %p256 = scmp.eq.s32.totalorder %s27, 0
      %p257 = por %p255, %p256
      %p258 = scmp.ne.s32.totalorder %s244, %s245
      %p259 = scmp.eq.s32.totalorder %s28, 1
      %p260 = por %p258, %p259
      %p262 = scmp.ne.s32.totalorder %s245, %s261
      %p263 = scmp.eq.s32.totalorder %s28, 0
      %p264 = por %p262, %p263
      %s265 = ssub.s32 %s22, %s29
      %p266 = scmp.eq.s32.totalorder %s265, 0
      %s268 = sadd.s32 %s267, 1
      %s269 = scalar_select %p266, %s267, %s268
      %p272 = pneg %p266
      %p273 = scmp.eq.s32.totalorder %s22, 1
      %p274 = por %p272, %p273
      %p275 = scmp.ne.s32.totalorder %s267, %s270
      %p276 = scmp.eq.s32.totalorder %s22, 0
      %p277 = por %p275, %p276
      %p278 = scmp.ne.s32.totalorder %s267, %s270
      %p279 = scmp.eq.s32.totalorder %s27, 1
      %p280 = por %p278, %p279
      %p281 = scmp.ne.s32.totalorder %s270, %s271
      %p282 = scmp.eq.s32.totalorder %s27, 0
      %p283 = por %p281, %p282
      %p284 = scmp.ne.s32.totalorder %s270, %s271
      %p285 = scmp.eq.s32.totalorder %s28, 1
      %p286 = por %p284, %p285
      %p288 = scmp.ne.s32.totalorder %s271, %s287
      %p289 = scmp.eq.s32.totalorder %s28, 0
      %p290 = por %p288, %p289
      %s292 = sadd.s32 %s291, 1
      %p295 = scmp.eq.s32.totalorder %s22, 1
      %p296 = scmp.ne.s32.totalorder %s291, %s293
      %p297 = scmp.eq.s32.totalorder %s22, 0
      %p298 = por %p296, %p297
      %p299 = scmp.ne.s32.totalorder %s291, %s293
      %p300 = scmp.eq.s32.totalorder %s27, 1
      %p301 = por %p299, %p300
      %p302 = scmp.ne.s32.totalorder %s293, %s294
      %p303 = scmp.eq.s32.totalorder %s27, 0
      %p304 = por %p302, %p303
      %p305 = scmp.ne.s32.totalorder %s293, %s294
      %p306 = scmp.eq.s32.totalorder %s28, 1
      %p307 = por %p305, %p306
      %p309 = scmp.ne.s32.totalorder %s294, %s308
      %p310 = scmp.eq.s32.totalorder %s28, 0
      %p311 = por %p309, %p310
      %s313 = sadd.s32 %s312, 1
      %p316 = scmp.eq.s32.totalorder %s22, 1
      %p317 = scmp.ne.s32.totalorder %s312, %s314
      %p318 = scmp.eq.s32.totalorder %s22, 0
      %p319 = por %p317, %p318
      %p320 = scmp.ne.s32.totalorder %s312, %s314
      %p321 = scmp.eq.s32.totalorder %s27, 1
      %p322 = por %p320, %p321
      %p323 = scmp.ne.s32.totalorder %s314, %s315
      %p324 = scmp.eq.s32.totalorder %s27, 0
      %p325 = por %p323, %p324
      %p326 = scmp.ne.s32.totalorder %s314, %s315
      %p327 = scmp.eq.s32.totalorder %s28, 1
      %p328 = por %p326, %p327
      %p330 = scmp.ne.s32.totalorder %s315, %s329
      %p331 = scmp.eq.s32.totalorder %s28, 0
      %p332 = por %p330, %p331
      %p333 = scmp.le.s32.totalorder 1, %s22
      %p334 = scmp.lt.s32.totalorder %s22, 3
      %p335 = pnand %p333, %p334
      %p336 = pneg %p335
      // Predicated region
      $region9: #{tpu_custom_call.1} parent=5 // pred_check
        _
      $region10: #{tpu_custom_call.1} parent=5 // pred_check_branch
        %338 = sbr.rel (%p335) target = $region12
      $region11: #{tpu_custom_call.1} parent=5 // pred_region
        %s339 = ssub.s32 %s22, 1
        // Predicated region
        $region13: #{tpu_custom_call.1} parent=11 // pred_check
          %p340 = pneg %p43
        $region14: #{tpu_custom_call.1} parent=11 // pred_check_branch
          %342 = sbr.rel (%p340) target = $region16
        $region15: #{tpu_custom_call.1} parent=11 // pred_region
          %344 = vsyncadd [#allocation6], 0
          %s345 = sshll.u32 %s0, 4
          %s346 = int_to_ptr.hbm [resolvable:$true] %s345
          %s347 = sshll.u32 [#allocation5], 4
          %s348 = int_to_ptr.vmem [resolvable:$true] %s347
          %353 = dma.hbm_to_vmem [thread:$0]  %s346, 128, %s348, [#allocation6], 64, 64, 4
        $region16: #{tpu_custom_call.1} parent=11 // pred_fallthru
          _
        // Predicated region
        $region17: #{tpu_custom_call.1} parent=11 // pred_check
          %p354 = pneg %p64
        $region18: #{tpu_custom_call.1} parent=11 // pred_check_branch
          %356 = sbr.rel (%p354) target = $region20
        $region19: #{tpu_custom_call.1} parent=11 // pred_region
          %358 = vsyncadd [#allocation9], 0
          %s359 = sshll.u32 %s1, 4
          %s360 = int_to_ptr.hbm [resolvable:$true] %s359
          %s361 = sshll.u32 [#allocation8], 4
          %s362 = int_to_ptr.vmem [resolvable:$true] %s361
          %367 = dma.hbm_to_vmem [thread:$0]  %s360, 256, %s362, [#allocation9], 128, 128, 8
        $region20: #{tpu_custom_call.1} parent=11 // pred_fallthru
          _
        // Predicated region
        $region21: #{tpu_custom_call.1} parent=11 // pred_check
          %p368 = pneg %p85
        $region22: #{tpu_custom_call.1} parent=11 // pred_check_branch
          %370 = sbr.rel (%p368) target = $region24
        $region23: #{tpu_custom_call.1} parent=11 // pred_region
          %372 = vsyncadd [#allocation9], 0
          %s373 = sshll.u32 %s2, 4
          %s374 = int_to_ptr.hbm [resolvable:$true] %s373
          %s375 = sshll.u32 [#allocation10], 4
          %s376 = int_to_ptr.vmem [resolvable:$true] %s375
          %381 = dma.hbm_to_vmem [thread:$0]  %s374, 256, %s376, [#allocation9], 128, 128, 8
        $region24: #{tpu_custom_call.1} parent=11 // pred_fallthru
          _
        // Predicated region
        $region25: #{tpu_custom_call.1} parent=11 // pred_check
          %p382 = pneg %p106
        $region26: #{tpu_custom_call.1} parent=11 // pred_check_branch
          %384 = sbr.rel (%p382) target = $region28
        $region27: #{tpu_custom_call.1} parent=11 // pred_region
          %386 = vsyncadd [#allocation12], 0
          %s387 = sshll.u32 %s3, 4
          %s388 = int_to_ptr.hbm [resolvable:$true] %s387
          %s389 = sshll.u32 [#allocation11], 4
          %s390 = int_to_ptr.vmem [resolvable:$true] %s389
          %395 = dma.hbm_to_vmem [thread:$0]  %s388, 256, %s390, [#allocation12], 128, 128, 8
        $region28: #{tpu_custom_call.1} parent=11 // pred_fallthru
          _
        // Predicated region
        $region29: #{tpu_custom_call.1} parent=11 // pred_check
          %p396 = pneg %p127
        $region30: #{tpu_custom_call.1} parent=11 // pred_check_branch
          %398 = sbr.rel (%p396) target = $region32
        $region31: #{tpu_custom_call.1} parent=11 // pred_region
          %400 = vsyncadd [#allocation12], 0
          %s402 = sshll.u32 %s4, 4
          %s403 = int_to_ptr.hbm [resolvable:$true] %s402
          %s404 = sshll.u32 [#allocation13], 4
          %s405 = int_to_ptr.vmem [resolvable:$true] %s404
          %407 = dma.hbm_to_vmem [thread:$0]  %s403, 128, %s405, [#allocation12]
        $region32: #{tpu_custom_call.1} parent=11 // pred_fallthru
          _
        // Predicated region
        $region33: #{tpu_custom_call.1} parent=11 // pred_check
          %p408 = pneg %p304
        $region34: #{tpu_custom_call.1} parent=11 // pred_check_branch
          %410 = sbr.rel (%p408) target = $region36
        $region35: #{tpu_custom_call.1} parent=11 // pred_region
          _
        $region36: #{tpu_custom_call.1} parent=11 // pred_fallthru
          _
      $region12: #{tpu_custom_call.1} parent=5 // pred_fallthru
        _
      %p411 = scmp.lt.s32.totalorder %s22, 2
      // Predicated region
      $region37: #{tpu_custom_call.1} parent=5 // pred_check
        %p412 = pneg %p411
      $region38: #{tpu_custom_call.1} parent=5 // pred_check_branch
        %414 = sbr.rel (%p412) target = $region40
      $region39: #{tpu_custom_call.1} parent=5 // pred_region
        // Predicated region
        $region41: #{tpu_custom_call.1} parent=39 // pred_check
          %p415 = pneg %p147
        $region42: #{tpu_custom_call.1} parent=39 // pred_check_branch
          %417 = sbr.rel (%p415) target = $region44
        $region43: #{tpu_custom_call.1} parent=39 // pred_region
          %p418 = scmp.lt.s32.totalorder %s22, 1
          %s419 = scalar_select %p418, %s22, 1
          %s420 = scalar_lea.vmem %s5, %s419
        $region44: #{tpu_custom_call.1} parent=39 // pred_fallthru
          _
        // Predicated region
        $region45: #{tpu_custom_call.1} parent=39 // pred_check
          %p421 = pneg %p173
        $region46: #{tpu_custom_call.1} parent=39 // pred_check_branch
          %423 = sbr.rel (%p421) target = $region48
        $region47: #{tpu_custom_call.1} parent=39 // pred_region
          %p424 = scmp.lt.s32.totalorder %s22, 1
          %s425 = scalar_select %p424, %s22, 1
          %s426 = smul.addr %s425, 4
          %s427 = smul.addr %s426, 4
          %s428 = scalar_lea.vmem %s6, %s427
        $region48: #{tpu_custom_call.1} parent=39 // pred_fallthru
          _
        // Predicated region
        $region49: #{tpu_custom_call.1} parent=39 // pred_check
          %p429 = pneg %p199
        $region50: #{tpu_custom_call.1} parent=39 // pred_check_branch
          %431 = sbr.rel (%p429) target = $region52
        $region51: #{tpu_custom_call.1} parent=39 // pred_region
          %p432 = scmp.lt.s32.totalorder %s22, 1
          %s433 = scalar_select %p432, %s22, 1
          %s434 = smul.addr %s433, 4
          %s435 = smul.addr %s434, 4
          %s436 = scalar_lea.vmem %s7, %s435
        $region52: #{tpu_custom_call.1} parent=39 // pred_fallthru
          _
        // Predicated region
        $region53: #{tpu_custom_call.1} parent=39 // pred_check
          %p437 = pneg %p225
        $region54: #{tpu_custom_call.1} parent=39 // pred_check_branch
          %439 = sbr.rel (%p437) target = $region56
        $region55: #{tpu_custom_call.1} parent=39 // pred_region
          %p440 = scmp.lt.s32.totalorder %s22, 1
          %s441 = scalar_select %p440, %s22, 1
          %s442 = scalar_lea.vmem %s8, %s441
        $region56: #{tpu_custom_call.1} parent=39 // pred_fallthru
          _
        // Predicated region
        $region57: #{tpu_custom_call.1} parent=39 // pred_check
          %p443 = pneg %p251
        $region58: #{tpu_custom_call.1} parent=39 // pred_check_branch
          %445 = sbr.rel (%p443) target = $region60
        $region59: #{tpu_custom_call.1} parent=39 // pred_region
          %p446 = scmp.lt.s32.totalorder %s22, 1
          %s447 = scalar_select %p446, %s22, 1
          %s448 = smul.addr %s447, 4
          %s449 = smul.addr %s448, 4
          %s450 = scalar_lea.vmem %s9, %s449
        $region60: #{tpu_custom_call.1} parent=39 // pred_fallthru
          _
        // Predicated region
        $region61: #{tpu_custom_call.1} parent=39 // pred_check
          %p451 = pneg %p277
        $region62: #{tpu_custom_call.1} parent=39 // pred_check_branch
          %453 = sbr.rel (%p451) target = $region64
        $region63: #{tpu_custom_call.1} parent=39 // pred_region
          %p454 = scmp.lt.s32.totalorder %s22, 1
          %s455 = scalar_select %p454, %s22, 1
          %s456 = smul.addr %s455, 8
          %s457 = smul.addr %s456, 4
          %s458 = scalar_lea.vmem %s10, %s457
        $region64: #{tpu_custom_call.1} parent=39 // pred_fallthru
          _
      $region40: #{tpu_custom_call.1} parent=5 // pred_fallthru
        _
      %p459 = scmp.le.s32.totalorder 1, %s22
      %p460 = scmp.lt.s32.totalorder %s22, 3
      %p461 = pnand %p459, %p460
      %p462 = pneg %p461
      // Predicated region
      $region65: #{tpu_custom_call.1} parent=5 // pred_check
        _
      $region66: #{tpu_custom_call.1} parent=5 // pred_check_branch
        %464 = sbr.rel (%p461) target = $region68
      $region67: #{tpu_custom_call.1} parent=5 // pred_region
        %s465 = ssub.s32 %s22, 1
        // Predicated region
        $region69: #{tpu_custom_call.1} parent=67 // pred_check
          %p466 = pneg %p43
        $region70: #{tpu_custom_call.1} parent=67 // pred_check_branch
          %468 = sbr.rel (%p466) target = $region72
        $region71: #{tpu_custom_call.1} parent=67 // pred_region
          %470 = dma.done [#allocation6], 128
        $region72: #{tpu_custom_call.1} parent=67 // pred_fallthru
          _
        // Predicated region
        $region73: #{tpu_custom_call.1} parent=67 // pred_check
          %p471 = pneg %p64
        $region74: #{tpu_custom_call.1} parent=67 // pred_check_branch
          %473 = sbr.rel (%p471) target = $region76
        $region75: #{tpu_custom_call.1} parent=67 // pred_region
          %475 = dma.done [#allocation9], 256
        $region76: #{tpu_custom_call.1} parent=67 // pred_fallthru
          _
        // Predicated region
        $region77: #{tpu_custom_call.1} parent=67 // pred_check
          %p476 = pneg %p85
        $region78: #{tpu_custom_call.1} parent=67 // pred_check_branch
          %478 = sbr.rel (%p476) target = $region80
        $region79: #{tpu_custom_call.1} parent=67 // pred_region
          %480 = dma.done [#allocation9], 256
        $region80: #{tpu_custom_call.1} parent=67 // pred_fallthru
          _
        // Predicated region
        $region81: #{tpu_custom_call.1} parent=67 // pred_check
          %p481 = pneg %p106
        $region82: #{tpu_custom_call.1} parent=67 // pred_check_branch
          %483 = sbr.rel (%p481) target = $region84
        $region83: #{tpu_custom_call.1} parent=67 // pred_region
          %485 = dma.done [#allocation12], 256
        $region84: #{tpu_custom_call.1} parent=67 // pred_fallthru
          _
        // Predicated region
        $region85: #{tpu_custom_call.1} parent=67 // pred_check
          %p486 = pneg %p127
        $region86: #{tpu_custom_call.1} parent=67 // pred_check_branch
          %488 = sbr.rel (%p486) target = $region88
        $region87: #{tpu_custom_call.1} parent=67 // pred_region
          %490 = dma.done [#allocation12], 128
        $region88: #{tpu_custom_call.1} parent=67 // pred_fallthru
          _
        %p491 = pneg %p43
        %p492 = pneg %p40
        %p493 = pneg %p64
        %p494 = pneg %p61
        %p495 = pneg %p85
        %p496 = pneg %p82
        %p497 = pneg %p106
        %p498 = pneg %p103
        %p499 = pneg %p127
        %p500 = pneg %p124
        %p501 = scmp.lt.s32.totalorder %s27, 1
        %s502 = scalar_select %p501, %s27, 1
        %s503 = scalar_lea.vmem %s5, %s502
        %p504 = pneg %p153
        %p505 = pneg %p150
        %p506 = scmp.lt.s32.totalorder %s27, 1
        %s507 = scalar_select %p506, %s27, 1
        %s508 = smul.addr %s507, 4
        %s509 = smul.addr %s508, 4
        %s510 = scalar_lea.vmem %s6, %s509
        %p511 = pneg %p179
        %p512 = pneg %p176
        %p513 = scmp.lt.s32.totalorder %s27, 1
        %s514 = scalar_select %p513, %s27, 1
        %s515 = smul.addr %s514, 4
        %s516 = smul.addr %s515, 4
        %s517 = scalar_lea.vmem %s7, %s516
        %p518 = pneg %p205
        %p519 = pneg %p202
        %p520 = scmp.lt.s32.totalorder %s27, 1
        %s521 = scalar_select %p520, %s27, 1
        %s522 = scalar_lea.vmem %s8, %s521
        %p523 = pneg %p231
        %p524 = pneg %p228
        %p525 = scmp.lt.s32.totalorder %s27, 1
        %s526 = scalar_select %p525, %s27, 1
        %s527 = smul.addr %s526, 4
        %s528 = smul.addr %s527, 4
        %s529 = scalar_lea.vmem %s9, %s528
        %p530 = pneg %p257
        %p531 = pneg %p254
        %p532 = scmp.lt.s32.totalorder %s27, 1
        %s533 = scalar_select %p532, %s27, 1
        %s534 = smul.addr %s533, 8
        %s535 = smul.addr %s534, 4
        %s536 = scalar_lea.vmem %s10, %s535
        %p537 = pneg %p283
        %p538 = pneg %p280
        %p539 = pneg %p304
        %p540 = pneg %p301
        %p541 = pneg %p325
        %p542 = pneg %p322
        %p543 = scmp.lt.s32.totalorder %s27, 1
        %s544 = scalar_select %p543, %s27, 1
        %s545 = scalar_lea.vmem %s5, %s544
        %p546 = scmp.lt.s32.totalorder %s27, 1
        %s547 = scalar_select %p546, %s27, 1
        %s548 = smul.addr %s547, 4
        %s549 = smul.addr %s548, 4
        %s550 = scalar_lea.vmem %s6, %s549
        %p551 = scmp.lt.s32.totalorder %s27, 1
        %s552 = scalar_select %p551, %s27, 1
        %s553 = smul.addr %s552, 4
        %s554 = smul.addr %s553, 4
        %s555 = scalar_lea.vmem %s7, %s554
        %p556 = scmp.lt.s32.totalorder %s27, 1
        %s557 = scalar_select %p556, %s27, 1
        %s558 = scalar_lea.vmem %s8, %s557
        %p559 = scmp.lt.s32.totalorder %s27, 1
        %s560 = scalar_select %p559, %s27, 1
        %s561 = smul.addr %s560, 4
        %s562 = smul.addr %s561, 4
        %s563 = scalar_lea.vmem %s9, %s562
        %p564 = scmp.lt.s32.totalorder %s27, 1
        %s565 = scalar_select %p564, %s27, 1
        %s566 = smul.addr %s565, 8
        %s567 = smul.addr %s566, 4
        %s568 = scalar_lea.vmem %s10, %s567
        %p570 = scmp.eq.s32.totalorder %s27, 0
        // Predicated region
        $region89: #{tpu_custom_call.1} parent=67 // pred_check
          %p571 = pneg %p570
        $region90: #{tpu_custom_call.1} parent=67 // pred_check_branch
          %573 = sbr.rel (%p571) target = $region92
        $region91: #{tpu_custom_call.1} parent=67 // pred_region
          %v574 = vld [vmem:[#allocation5] sm:$0xf]
          %v575 = vld [vmem:[#allocation5 + $0x4] sm:$0xf]
          %v576 = vunpack.c.l.bf16 %v574
          %v577 = vunpack.c.l.bf16 %v575
          %vm578 = vcmask 261120
          %579 = vst.msk [vmem:[#allocation2] sm:$0xff] %vm578, %v576
          %580 = vst.msk [vmem:[#allocation2 + $0x8] sm:$0xff] %vm578, %v577
        $region92: #{tpu_custom_call.1} parent=67 // pred_fallthru
          _
        %v581 = vld [vmem:[#allocation2] sm:$0xff]
        %v582 = vld [vmem:[#allocation2 + $0x8] sm:$0xff]
        %v583 = vld [vmem:[#allocation8] sm:$0xff]
        %v584 = vld [vmem:[#allocation8 + $0x8] sm:$0xff]
        %v585 = vld [vmem:[#allocation10] sm:$0xff]
        %v586 = vld [vmem:[#allocation10 + $0x8] sm:$0xff]
        %v587 = vld [vmem:[#allocation11] sm:$0xff]
        %v588 = vld [vmem:[#allocation11 + $0x8] sm:$0xff]
        %v589 = vld [vmem:[#allocation13] sm:$0xff]
        %v590 = vld [vmem:[%s545] sm:$0x1]
        %v591 = vmul.f32 %v581, %v581
        %v592 = vmul.f32 %v582, %v582
        %vm593 = vcmask 261120
        %v594 = vsel %vm593, %v591, 0.0
        %595 = vadd.xlane.f32.xlu0 %v594
        %v596 = vpop.xlane.xlu0 %595
        %v597 = vsel %vm593, %v592, 0.0
        %598 = vadd.xlane.f32.xlu0 %v597
        %v599 = vpop.xlane.xlu0 %598
        %v600 = vrcp.pop 32.0
        %v601 = vmul.f32 32.0, %v600
        %v602 = vsub.f32 1.0, %v601
        %v603 = vmul.f32 %v600, %v602
        %v604 = vadd.f32 %v600, %v603
        %vm605 = vweird.f32 %v600
        %v606 = vsel %vm605, %v600, %v604
        %v607 = vmul.f32 %v596, %v606
        %v608 = vmul.f32 %v599, %v606
        %v609 = vadd.f32 %v607, 1e-06
        %v610 = vadd.f32 %v608, 1e-06
        %v611 = vrsqrt.pop %v609
        %v612 = vmul.f32 %v611, %v609
        %v613 = vmul.f32 %v612, %v611
        %v614 = vmul.f32 0.5, %v613
        %v615 = vsub.f32 1.5, %v614
        %v616 = vmul.f32 %v611, %v615
        %vm617 = vweird.f32 %v609
        %vm618 = vweird.f32 %v611
        %vm619 = vmor %vm617, %vm618
        %v620 = vsel %vm619, %v611, %v616
        %v621 = vrsqrt.pop %v610
        %v622 = vmul.f32 %v621, %v610
        %v623 = vmul.f32 %v622, %v621
        %v624 = vmul.f32 0.5, %v623
        %v625 = vsub.f32 1.5, %v624
        %v626 = vmul.f32 %v621, %v625
        %vm627 = vweird.f32 %v610
        %vm628 = vweird.f32 %v621
        %vm629 = vmor %vm627, %vm628
        %v630 = vsel %vm629, %v621, %v626
        %v631 = vmul.f32 %v581, %v620
        %v632 = vmul.f32 %v582, %v630
        %v634 = vperm.slane %v590, 0
        %v636 = vmul.f32 %v631, %v634
        %v637 = vmul.f32 %v632, %v634
        %v638 = vpack.c.bf16 %v637, %v636
        %v639 = vld [vmem:[%s550] sm:$0xf]
        %v640 = vld [vmem:[%s550 + $0x4] sm:$0xf]
        %v641 = vld [vmem:[%s550 + $0x8] sm:$0xf]
        %v642 = vld [vmem:[%s550 + $0xc] sm:$0xf]
        %v647 = vunpack.c.l.b16 %v639
        %v648 = vunpack.c.l.b16 %v640
        %v649 = vunpack.c.l.b16 %v641
        %v650 = vunpack.c.l.b16 %v642
        %v651 = vpack.c.b16 %v648, %v647
        %v652 = vpack.c.b16 %v650, %v649
        %v656 = vsel %vm593, %v638, 0
        %658 = vmatpush.bf16.msra.mxu0 0
        %659 = vmatpush.bf16.msra.mxu0 0
        %660 = vmatpush.bf16.msra.mxu0 0
        %661 = vmatpush.bf16.msra.mxu0 0
        %662 = vmatpush.bf16.msra.mxu0 0
        %663 = vmatpush.bf16.msra.mxu0 0
        %664 = vmatpush.bf16.msra.mxu0 %v652
        %665 = vmatpush.bf16.msra.mxu0 %v651
        %666 = vmatmul.bf16.gmra.mxu0 %v656
        %v667 = vpop.f32.mrf.mxu0
        %v668 = vadd.f32 0.0, %v667
        %v669 = vpop.f32.mrf.mxu0
        %v670 = vadd.f32 0.0, %v669
        %671 = vdwg.mxu0
        %v672 = vmul.f32 %v668, 0.35355338
        %v673 = vmul.f32 %v670, 0.35355338
        %676 = vrot.lane.b32.xlu0 %v672, 124
        %v677 = vpop.permute.xlu0 %676
        %678 = vrot.lane.b32.xlu0 %v673, 124
        %v679 = vpop.permute.xlu0 %678
        %682 = vrot.lane.b32.xlu0 %v672, 28
        %v683 = vpop.permute.xlu0 %682
        %684 = vrot.lane.b32.xlu0 %v673, 28
        %v685 = vpop.permute.xlu0 %684
        %vm688 = vcmask 228352
        %v689 = vsel %vm688, %v677, %v683
        %v690 = vsel %vm688, %v679, %v685
        %691 = vrot.lane.b32.xlu0 %v672, 100
        %v692 = vpop.permute.xlu0 %691
        %693 = vrot.lane.b32.xlu0 %v673, 100
        %v694 = vpop.permute.xlu0 %693
        %697 = vrot.lane.b32.xlu0 %v672, 4
        %v698 = vpop.permute.xlu0 %697
        %699 = vrot.lane.b32.xlu0 %v673, 4
        %v700 = vpop.permute.xlu0 %699
        %vm703 = vcmask 31744
        %v704 = vsel %vm703, %v692, %v698
        %v705 = vsel %vm703, %v694, %v700
        %v706 = vmul.f32 %v672, %v583
        %v707 = vmul.f32 %v673, %v584
        %v708 = vmul.f32 %v689, %v585
        %v709 = vmul.f32 %v690, %v586
        %v710 = vadd.f32 %v706, %v708
        %v711 = vadd.f32 %v707, %v709
        %v712 = vmul.f32 %v704, %v587
        %v713 = vmul.f32 %v705, %v588
        %v714 = vadd.f32 %v710, %v712
        %v715 = vadd.f32 %v711, %v713
        %716 = vst.msk [vmem:[#allocation3] sm:$0xff] %vm593, %v714
        %717 = vst.msk [vmem:[#allocation3 + $0x8] sm:$0xff] %vm593, %v715
        %720 = vrot.lane.b32.xlu0 %v668, 92
        %v721 = vpop.permute.xlu0 %720
        %722 = vrot.lane.b32.xlu0 %v670, 92
        %v723 = vpop.permute.xlu0 %722
        %726 = vrot.lane.b32.xlu0 %v668, 124
        %v727 = vpop.permute.xlu0 %726
        %728 = vrot.lane.b32.xlu0 %v670, 124
        %v729 = vpop.permute.xlu0 %728
        %v732 = vsel %vm688, %v721, %v727
        %v733 = vsel %vm688, %v723, %v729
        %734 = vrot.lane.b32.xlu0 %v668, 68
        %v735 = vpop.permute.xlu0 %734
        %736 = vrot.lane.b32.xlu0 %v670, 68
        %v737 = vpop.permute.xlu0 %736
        %740 = vrot.lane.b32.xlu0 %v668, 100
        %v741 = vpop.permute.xlu0 %740
        %742 = vrot.lane.b32.xlu0 %v670, 100
        %v743 = vpop.permute.xlu0 %742
        %v746 = vsel %vm703, %v735, %v741
        %v747 = vsel %vm703, %v737, %v743
        %750 = vrot.lane.b32.xlu0 %v583, 32
        %v751 = vpop.permute.xlu0 %750
        %752 = vrot.lane.b32.xlu0 %v584, 32
        %v753 = vpop.permute.xlu0 %752
        %v756 = vmul.f32 %v668, %v751
        %v757 = vmul.f32 %v670, %v753
        %v758 = vmul.f32 %v732, %v585
        %v759 = vmul.f32 %v733, %v586
        %762 = vrot.lane.b32.xlu0 %v758, 32
        %v763 = vpop.permute.xlu0 %762
        %764 = vrot.lane.b32.xlu0 %v759, 32
        %v765 = vpop.permute.xlu0 %764
        %v768 = vadd.f32 %v756, %v763
        %v769 = vadd.f32 %v757, %v765
        %v770 = vmul.f32 %v746, %v587
        %v771 = vmul.f32 %v747, %v588
        %774 = vrot.lane.b32.xlu0 %v770, 32
        %v775 = vpop.permute.xlu0 %774
        %776 = vrot.lane.b32.xlu0 %v771, 32
        %v777 = vpop.permute.xlu0 %776
        %v780 = vadd.f32 %v768, %v775
        %v781 = vadd.f32 %v769, %v777
        %vm782 = vcmask 523520
        %783 = vst.msk [vmem:[#allocation3] sm:$0xff] %vm782, %v780
        %784 = vst.msk [vmem:[#allocation3 + $0x8] sm:$0xff] %vm782, %v781
        %vm785 = vcmask 785920
        %786 = vst.msk [vmem:[#allocation3] sm:$0xff] %vm785, %v668
        %787 = vst.msk [vmem:[#allocation3 + $0x8] sm:$0xff] %vm785, %v670
        %v788 = vld [vmem:[#allocation3] sm:$0xff]
        %v789 = vpack.c.bf16 %v788, %v788
        %791 = vrot.lane.b32.xlu0 %v789, 96
        %v792 = vpop.permute.xlu0 %791
        %vm793 = vcmask 64512
        %v795 = vsel %vm793, %v789, 0
        %v798 = vsel %vm793, %v792, 0
        %800 = vmatpush.bf16.xpose.msra.mxu0 0
        %801 = vmatpush.bf16.xpose.msra.mxu0 0
        %802 = vmatpush.bf16.xpose.msra.mxu0 0
        %803 = vmatpush.bf16.xpose.msra.mxu0 0
        %804 = vmatpush.bf16.xpose.msra.mxu0 0
        %805 = vmatpush.bf16.xpose.msra.mxu0 0
        %806 = vmatpush.bf16.xpose.msra.mxu0 0
        %807 = vmatpush.bf16.xpose.msra.mxu0 %v798
        %808 = vmatmul.bf16.gmra.mxu0 %v795
        %v809 = vpop.f32.mrf.mxu0
        %v810 = vadd.f32 %v589, %v809
        %v811 = vpop.f32.mrf.mxu0
        %812 = vdwg.mxu0
        %v813 = vsel %vm793, %v810, -inf
        %814 = vmax.xlane.f32.xlu0 %v813
        %v815 = vpop.xlane.xlu0 %814
        %v816 = vsub.f32 %v810, %v815
        %v817 = vmul.f32 %v816, 1.442695
        %v818 = vpow.pop %v817
        %v819 = vsel %vm793, %v818, 0.0
        %820 = vadd.xlane.f32.xlu0 %v819
        %v821 = vpop.xlane.xlu0 %820
        %v822 = vrcp.pop %v821
        %v823 = vmul.f32 %v818, %v822
        %v824 = vpack.c.bf16 %v823, %v823
        %825 = vrot.lane.b32.xlu0 %v789, 64
        %v826 = vpop.permute.xlu0 %825
        %v828 = vsel %vm793, %v824, 0
        %vm830 = vcmask 1043456
        %v832 = vsel %vm830, %v826, 0
        %834 = vmatpush.bf16.msra.mxu0 0
        %835 = vmatpush.bf16.msra.mxu0 0
        %836 = vmatpush.bf16.msra.mxu0 0
        %837 = vmatpush.bf16.msra.mxu0 0
        %838 = vmatpush.bf16.msra.mxu0 0
        %839 = vmatpush.bf16.msra.mxu0 0
        %840 = vmatpush.bf16.msra.mxu0 0
        %841 = vmatpush.bf16.msra.mxu0 %v832
        %842 = vmatmul.bf16.gmra.mxu0 %v828
        %v843 = vpop.f32.mrf.mxu0
        %v844 = vadd.f32 0.0, %v843
        %v845 = vpop.f32.mrf.mxu0
        %846 = vdwg.mxu0
        %847 = vst.msk [vmem:[#allocation4] sm:$0xff] %vm793, %v844
        %848 = vrot.lane.b32.xlu0 %v789, 120
        %v849 = vpop.permute.xlu0 %848
        %850 = vrot.lane.b32.xlu0 %v789, 88
        %v851 = vpop.permute.xlu0 %850
        %v853 = vsel %vm793, %v849, 0
        %v856 = vsel %vm793, %v851, 0
        %858 = vmatpush.bf16.xpose.msra.mxu0 0
        %859 = vmatpush.bf16.xpose.msra.mxu0 0
        %860 = vmatpush.bf16.xpose.msra.mxu0 0
        %861 = vmatpush.bf16.xpose.msra.mxu0 0
        %862 = vmatpush.bf16.xpose.msra.mxu0 0
        %863 = vmatpush.bf16.xpose.msra.mxu0 0
        %864 = vmatpush.bf16.xpose.msra.mxu0 0
        %865 = vmatpush.bf16.xpose.msra.mxu0 %v856
        %866 = vmatmul.bf16.gmra.mxu0 %v853
        %v867 = vpop.f32.mrf.mxu0
        %v868 = vadd.f32 %v589, %v867
        %v869 = vpop.f32.mrf.mxu0
        %870 = vdwg.mxu0
        %v871 = vsel %vm793, %v868, -inf
        %872 = vmax.xlane.f32.xlu0 %v871
        %v873 = vpop.xlane.xlu0 %872
        %v874 = vsub.f32 %v868, %v873
        %v875 = vmul.f32 %v874, 1.442695
        %v876 = vpow.pop %v875
        %v877 = vsel %vm793, %v876, 0.0
        %878 = vadd.xlane.f32.xlu0 %v877
        %v879 = vpop.xlane.xlu0 %878
        %v880 = vrcp.pop %v879
        %v881 = vmul.f32 %v876, %v880
        %v882 = vpack.c.bf16 %v881, %v881
        %883 = vrot.lane.b32.xlu0 %v789, 56
        %v884 = vpop.permute.xlu0 %883
        %v886 = vsel %vm793, %v882, 0
        %v889 = vsel %vm830, %v884, 0
        %891 = vmatpush.bf16.msra.mxu0 0
        %892 = vmatpush.bf16.msra.mxu0 0
        %893 = vmatpush.bf16.msra.mxu0 0
        %894 = vmatpush.bf16.msra.mxu0 0
        %895 = vmatpush.bf16.msra.mxu0 0
        %896 = vmatpush.bf16.msra.mxu0 0
        %897 = vmatpush.bf16.msra.mxu0 0
        %898 = vmatpush.bf16.msra.mxu0 %v889
        %899 = vmatmul.bf16.gmra.mxu0 %v886
        %v900 = vpop.f32.mrf.mxu0
        %v901 = vadd.f32 0.0, %v900
        %v902 = vpop.f32.mrf.mxu0
        %903 = vdwg.mxu0
        %905 = vrot.lane.b32.xlu0 %v901, 8
        %v906 = vpop.permute.xlu0 %905
        %vm908 = vcmask 130112
        %909 = vst.msk [vmem:[#allocation4] sm:$0xff] %vm908, %v906
        %910 = vrot.lane.b32.xlu0 %v789, 112
        %v911 = vpop.permute.xlu0 %910
        %912 = vrot.lane.b32.xlu0 %v789, 80
        %v913 = vpop.permute.xlu0 %912
        %v915 = vsel %vm793, %v911, 0
        %v918 = vsel %vm793, %v913, 0
        %920 = vmatpush.bf16.xpose.msra.mxu0 0
        %921 = vmatpush.bf16.xpose.msra.mxu0 0
        %922 = vmatpush.bf16.xpose.msra.mxu0 0
        %923 = vmatpush.bf16.xpose.msra.mxu0 0
        %924 = vmatpush.bf16.xpose.msra.mxu0 0
        %925 = vmatpush.bf16.xpose.msra.mxu0 0
        %926 = vmatpush.bf16.xpose.msra.mxu0 0
        %927 = vmatpush.bf16.xpose.msra.mxu0 %v918
        %928 = vmatmul.bf16.gmra.mxu0 %v915
        %v929 = vpop.f32.mrf.mxu0
        %v930 = vadd.f32 %v589, %v929
        %v931 = vpop.f32.mrf.mxu0
        %932 = vdwg.mxu0
        %v933 = vsel %vm793, %v930, -inf
        %934 = vmax.xlane.f32.xlu0 %v933
        %v935 = vpop.xlane.xlu0 %934
        %v936 = vsub.f32 %v930, %v935
        %v937 = vmul.f32 %v936, 1.442695
        %v938 = vpow.pop %v937
        %v939 = vsel %vm793, %v938, 0.0
        %940 = vadd.xlane.f32.xlu0 %v939
        %v941 = vpop.xlane.xlu0 %940
        %v942 = vrcp.pop %v941
        %v943 = vmul.f32 %v938, %v942
        %v944 = vpack.c.bf16 %v943, %v943
        %945 = vrot.lane.b32.xlu0 %v789, 48
        %v946 = vpop.permute.xlu0 %945
        %v948 = vsel %vm793, %v944, 0
        %v951 = vsel %vm830, %v946, 0
        %953 = vmatpush.bf16.msra.mxu0 0
        %954 = vmatpush.bf16.msra.mxu0 0
        %955 = vmatpush.bf16.msra.mxu0 0
        %956 = vmatpush.bf16.msra.mxu0 0
        %957 = vmatpush.bf16.msra.mxu0 0
        %958 = vmatpush.bf16.msra.mxu0 0
        %959 = vmatpush.bf16.msra.mxu0 0
        %960 = vmatpush.bf16.msra.mxu0 %v951
        %961 = vmatmul.bf16.gmra.mxu0 %v948
        %v962 = vpop.f32.mrf.mxu0
        %v963 = vadd.f32 0.0, %v962
        %v964 = vpop.f32.mrf.mxu0
        %965 = vdwg.mxu0
        %967 = vrot.lane.b32.xlu0 %v963, 16
        %v968 = vpop.permute.xlu0 %967
        %vm970 = vcmask 195712
        %971 = vst.msk [vmem:[#allocation4] sm:$0xff] %vm970, %v968
        %972 = vrot.lane.b32.xlu0 %v789, 104
        %v973 = vpop.permute.xlu0 %972
        %974 = vrot.lane.b32.xlu0 %v789, 72
        %v975 = vpop.permute.xlu0 %974
        %v977 = vsel %vm793, %v973, 0
        %v980 = vsel %vm793, %v975, 0
        %982 = vmatpush.bf16.xpose.msra.mxu0 0
        %983 = vmatpush.bf16.xpose.msra.mxu0 0
        %984 = vmatpush.bf16.xpose.msra.mxu0 0
        %985 = vmatpush.bf16.xpose.msra.mxu0 0
        %986 = vmatpush.bf16.xpose.msra.mxu0 0
        %987 = vmatpush.bf16.xpose.msra.mxu0 0
        %988 = vmatpush.bf16.xpose.msra.mxu0 0
        %989 = vmatpush.bf16.xpose.msra.mxu0 %v980
        %990 = vmatmul.bf16.gmra.mxu0 %v977
        %v991 = vpop.f32.mrf.mxu0
        %v992 = vadd.f32 %v589, %v991
        %v993 = vpop.f32.mrf.mxu0
        %994 = vdwg.mxu0
        %v995 = vsel %vm793, %v992, -inf
        %996 = vmax.xlane.f32.xlu0 %v995
        %v997 = vpop.xlane.xlu0 %996
        %v998 = vsub.f32 %v992, %v997
        %v999 = vmul.f32 %v998, 1.442695
        %v1000 = vpow.pop %v999
        %v1001 = vsel %vm793, %v1000, 0.0
        %1002 = vadd.xlane.f32.xlu0 %v1001
        %v1003 = vpop.xlane.xlu0 %1002
        %v1004 = vrcp.pop %v1003
        %v1005 = vmul.f32 %v1000, %v1004
        %v1006 = vpack.c.bf16 %v1005, %v1005
        %1007 = vrot.lane.b32.xlu0 %v789, 40
        %v1008 = vpop.permute.xlu0 %1007
        %v1010 = vsel %vm793, %v1006, 0
        %v1013 = vsel %vm830, %v1008, 0
        %1015 = vmatpush.bf16.msra.mxu0 0
        %1016 = vmatpush.bf16.msra.mxu0 0
        %1017 = vmatpush.bf16.msra.mxu0 0
        %1018 = vmatpush.bf16.msra.mxu0 0
        %1019 = vmatpush.bf16.msra.mxu0 0
        %1020 = vmatpush.bf16.msra.mxu0 0
        %1021 = vmatpush.bf16.msra.mxu0 0
        %1022 = vmatpush.bf16.msra.mxu0 %v1013
        %1023 = vmatmul.bf16.gmra.mxu0 %v1010
        %v1024 = vpop.f32.mrf.mxu0
        %v1025 = vadd.f32 0.0, %v1024
        %v1026 = vpop.f32.mrf.mxu0
        %1027 = vdwg.mxu0
        %1029 = vrot.lane.b32.xlu0 %v1025, 24
        %v1030 = vpop.permute.xlu0 %1029
        %vm1032 = vcmask 261312
        %1033 = vst.msk [vmem:[#allocation4] sm:$0xff] %vm1032, %v1030
        %v1034 = vld [vmem:[#allocation3 + $0x8] sm:$0xff]
        %v1035 = vpack.c.bf16 %v1034, %v1034
        %1037 = vrot.lane.b32.xlu0 %v1035, 96
        %v1038 = vpop.permute.xlu0 %1037
        %v1040 = vsel %vm793, %v1035, 0
        %v1043 = vsel %vm793, %v1038, 0
        %1045 = vmatpush.bf16.xpose.msra.mxu0 0
        %1046 = vmatpush.bf16.xpose.msra.mxu0 0
        %1047 = vmatpush.bf16.xpose.msra.mxu0 0
        %1048 = vmatpush.bf16.xpose.msra.mxu0 0
        %1049 = vmatpush.bf16.xpose.msra.mxu0 0
        %1050 = vmatpush.bf16.xpose.msra.mxu0 0
        %1051 = vmatpush.bf16.xpose.msra.mxu0 0
        %1052 = vmatpush.bf16.xpose.msra.mxu0 %v1043
        %1053 = vmatmul.bf16.gmra.mxu0 %v1040
        %v1054 = vpop.f32.mrf.mxu0
        %v1055 = vadd.f32 %v589, %v1054
        %v1056 = vpop.f32.mrf.mxu0
        %1057 = vdwg.mxu0
        %v1058 = vsel %vm793, %v1055, -inf
        %1059 = vmax.xlane.f32.xlu0 %v1058
        %v1060 = vpop.xlane.xlu0 %1059
        %v1061 = vsub.f32 %v1055, %v1060
        %v1062 = vmul.f32 %v1061, 1.442695
        %v1063 = vpow.pop %v1062
        %v1064 = vsel %vm793, %v1063, 0.0
        %1065 = vadd.xlane.f32.xlu0 %v1064
        %v1066 = vpop.xlane.xlu0 %1065
        %v1067 = vrcp.pop %v1066
        %v1068 = vmul.f32 %v1063, %v1067
        %v1069 = vpack.c.bf16 %v1068, %v1068
        %1070 = vrot.lane.b32.xlu0 %v1035, 64
        %v1071 = vpop.permute.xlu0 %1070
        %v1073 = vsel %vm793, %v1069, 0
        %v1076 = vsel %vm830, %v1071, 0
        %1078 = vmatpush.bf16.msra.mxu0 0
        %1079 = vmatpush.bf16.msra.mxu0 0
        %1080 = vmatpush.bf16.msra.mxu0 0
        %1081 = vmatpush.bf16.msra.mxu0 0
        %1082 = vmatpush.bf16.msra.mxu0 0
        %1083 = vmatpush.bf16.msra.mxu0 0
        %1084 = vmatpush.bf16.msra.mxu0 0
        %1085 = vmatpush.bf16.msra.mxu0 %v1076
        %1086 = vmatmul.bf16.gmra.mxu0 %v1073
        %v1087 = vpop.f32.mrf.mxu0
        %v1088 = vadd.f32 0.0, %v1087
        %v1089 = vpop.f32.mrf.mxu0
        %1090 = vdwg.mxu0
        %1091 = vst.msk [vmem:[#allocation4 + $0x8] sm:$0xff] %vm793, %v1088
        %1092 = vrot.lane.b32.xlu0 %v1035, 120
        %v1093 = vpop.permute.xlu0 %1092
        %1094 = vrot.lane.b32.xlu0 %v1035, 88
        %v1095 = vpop.permute.xlu0 %1094
        %v1097 = vsel %vm793, %v1093, 0
        %v1100 = vsel %vm793, %v1095, 0
        %1102 = vmatpush.bf16.xpose.msra.mxu0 0
        %1103 = vmatpush.bf16.xpose.msra.mxu0 0
        %1104 = vmatpush.bf16.xpose.msra.mxu0 0
        %1105 = vmatpush.bf16.xpose.msra.mxu0 0
        %1106 = vmatpush.bf16.xpose.msra.mxu0 0
        %1107 = vmatpush.bf16.xpose.msra.mxu0 0
        %1108 = vmatpush.bf16.xpose.msra.mxu0 0
        %1109 = vmatpush.bf16.xpose.msra.mxu0 %v1100
        %1110 = vmatmul.bf16.gmra.mxu0 %v1097
        %v1111 = vpop.f32.mrf.mxu0
        %v1112 = vadd.f32 %v589, %v1111
        %v1113 = vpop.f32.mrf.mxu0
        %1114 = vdwg.mxu0
        %v1115 = vsel %vm793, %v1112, -inf
        %1116 = vmax.xlane.f32.xlu0 %v1115
        %v1117 = vpop.xlane.xlu0 %1116
        %v1118 = vsub.f32 %v1112, %v1117
        %v1119 = vmul.f32 %v1118, 1.442695
        %v1120 = vpow.pop %v1119
        %v1121 = vsel %vm793, %v1120, 0.0
        %1122 = vadd.xlane.f32.xlu0 %v1121
        %v1123 = vpop.xlane.xlu0 %1122
        %v1124 = vrcp.pop %v1123
        %v1125 = vmul.f32 %v1120, %v1124
        %v1126 = vpack.c.bf16 %v1125, %v1125
        %1127 = vrot.lane.b32.xlu0 %v1035, 56
        %v1128 = vpop.permute.xlu0 %1127
        %v1130 = vsel %vm793, %v1126, 0
        %v1133 = vsel %vm830, %v1128, 0
        %1135 = vmatpush.bf16.msra.mxu0 0
        %1136 = vmatpush.bf16.msra.mxu0 0
        %1137 = vmatpush.bf16.msra.mxu0 0
        %1138 = vmatpush.bf16.msra.mxu0 0
        %1139 = vmatpush.bf16.msra.mxu0 0
        %1140 = vmatpush.bf16.msra.mxu0 0
        %1141 = vmatpush.bf16.msra.mxu0 0
        %1142 = vmatpush.bf16.msra.mxu0 %v1133
        %1143 = vmatmul.bf16.gmra.mxu0 %v1130
        %v1144 = vpop.f32.mrf.mxu0
        %v1145 = vadd.f32 0.0, %v1144
        %v1146 = vpop.f32.mrf.mxu0
        %1147 = vdwg.mxu0
        %1149 = vrot.lane.b32.xlu0 %v1145, 8
        %v1150 = vpop.permute.xlu0 %1149
        %1152 = vst.msk [vmem:[#allocation4 + $0x8] sm:$0xff] %vm908, %v1150
        %1153 = vrot.lane.b32.xlu0 %v1035, 112
        %v1154 = vpop.permute.xlu0 %1153
        %1155 = vrot.lane.b32.xlu0 %v1035, 80
        %v1156 = vpop.permute.xlu0 %1155
        %v1158 = vsel %vm793, %v1154, 0
        %v1161 = vsel %vm793, %v1156, 0
        %1163 = vmatpush.bf16.xpose.msra.mxu0 0
        %1164 = vmatpush.bf16.xpose.msra.mxu0 0
        %1165 = vmatpush.bf16.xpose.msra.mxu0 0
        %1166 = vmatpush.bf16.xpose.msra.mxu0 0
        %1167 = vmatpush.bf16.xpose.msra.mxu0 0
        %1168 = vmatpush.bf16.xpose.msra.mxu0 0
        %1169 = vmatpush.bf16.xpose.msra.mxu0 0
        %1170 = vmatpush.bf16.xpose.msra.mxu0 %v1161
        %1171 = vmatmul.bf16.gmra.mxu0 %v1158
        %v1172 = vpop.f32.mrf.mxu0
        %v1173 = vadd.f32 %v589, %v1172
        %v1174 = vpop.f32.mrf.mxu0
        %1175 = vdwg.mxu0
        %v1176 = vsel %vm793, %v1173, -inf
        %1177 = vmax.xlane.f32.xlu0 %v1176
        %v1178 = vpop.xlane.xlu0 %1177
        %v1179 = vsub.f32 %v1173, %v1178
        %v1180 = vmul.f32 %v1179, 1.442695
        %v1181 = vpow.pop %v1180
        %v1182 = vsel %vm793, %v1181, 0.0
        %1183 = vadd.xlane.f32.xlu0 %v1182
        %v1184 = vpop.xlane.xlu0 %1183
        %v1185 = vrcp.pop %v1184
        %v1186 = vmul.f32 %v1181, %v1185
        %v1187 = vpack.c.bf16 %v1186, %v1186
        %1188 = vrot.lane.b32.xlu0 %v1035, 48
        %v1189 = vpop.permute.xlu0 %1188
        %v1191 = vsel %vm793, %v1187, 0
        %v1194 = vsel %vm830, %v1189, 0
        %1196 = vmatpush.bf16.msra.mxu0 0
        %1197 = vmatpush.bf16.msra.mxu0 0
        %1198 = vmatpush.bf16.msra.mxu0 0
        %1199 = vmatpush.bf16.msra.mxu0 0
        %1200 = vmatpush.bf16.msra.mxu0 0
        %1201 = vmatpush.bf16.msra.mxu0 0
        %1202 = vmatpush.bf16.msra.mxu0 0
        %1203 = vmatpush.bf16.msra.mxu0 %v1194
        %1204 = vmatmul.bf16.gmra.mxu0 %v1191
        %v1205 = vpop.f32.mrf.mxu0
        %v1206 = vadd.f32 0.0, %v1205
        %v1207 = vpop.f32.mrf.mxu0
        %1208 = vdwg.mxu0
        %1210 = vrot.lane.b32.xlu0 %v1206, 16
        %v1211 = vpop.permute.xlu0 %1210
        %1213 = vst.msk [vmem:[#allocation4 + $0x8] sm:$0xff] %vm970, %v1211
        %1214 = vrot.lane.b32.xlu0 %v1035, 104
        %v1215 = vpop.permute.xlu0 %1214
        %1216 = vrot.lane.b32.xlu0 %v1035, 72
        %v1217 = vpop.permute.xlu0 %1216
        %v1219 = vsel %vm793, %v1215, 0
        %v1222 = vsel %vm793, %v1217, 0
        %1224 = vmatpush.bf16.xpose.msra.mxu0 0
        %1225 = vmatpush.bf16.xpose.msra.mxu0 0
        %1226 = vmatpush.bf16.xpose.msra.mxu0 0
        %1227 = vmatpush.bf16.xpose.msra.mxu0 0
        %1228 = vmatpush.bf16.xpose.msra.mxu0 0
        %1229 = vmatpush.bf16.xpose.msra.mxu0 0
        %1230 = vmatpush.bf16.xpose.msra.mxu0 0
        %1231 = vmatpush.bf16.xpose.msra.mxu0 %v1222
        %1232 = vmatmul.bf16.gmra.mxu0 %v1219
        %v1233 = vpop.f32.mrf.mxu0
        %v1234 = vadd.f32 %v589, %v1233
        %v1235 = vpop.f32.mrf.mxu0
        %1236 = vdwg.mxu0
        %v1237 = vsel %vm793, %v1234, -inf
        %1238 = vmax.xlane.f32.xlu0 %v1237
        %v1239 = vpop.xlane.xlu0 %1238
        %v1240 = vsub.f32 %v1234, %v1239
        %v1241 = vmul.f32 %v1240, 1.442695
        %v1242 = vpow.pop %v1241
        %v1243 = vsel %vm793, %v1242, 0.0
        %1244 = vadd.xlane.f32.xlu0 %v1243
        %v1245 = vpop.xlane.xlu0 %1244
        %v1246 = vrcp.pop %v1245
        %v1247 = vmul.f32 %v1242, %v1246
        %v1248 = vpack.c.bf16 %v1247, %v1247
        %1249 = vrot.lane.b32.xlu0 %v1035, 40
        %v1250 = vpop.permute.xlu0 %1249
        %v1252 = vsel %vm793, %v1248, 0
        %v1255 = vsel %vm830, %v1250, 0
        %1257 = vmatpush.bf16.msra.mxu0 0
        %1258 = vmatpush.bf16.msra.mxu0 0
        %1259 = vmatpush.bf16.msra.mxu0 0
        %1260 = vmatpush.bf16.msra.mxu0 0
        %1261 = vmatpush.bf16.msra.mxu0 0
        %1262 = vmatpush.bf16.msra.mxu0 0
        %1263 = vmatpush.bf16.msra.mxu0 0
        %1264 = vmatpush.bf16.msra.mxu0 %v1255
        %1265 = vmatmul.bf16.gmra.mxu0 %v1252
        %v1266 = vpop.f32.mrf.mxu0
        %v1267 = vadd.f32 0.0, %v1266
        %v1268 = vpop.f32.mrf.mxu0
        %1269 = vdwg.mxu0
        %1271 = vrot.lane.b32.xlu0 %v1267, 24
        %v1272 = vpop.permute.xlu0 %1271
        %1274 = vst.msk [vmem:[#allocation4 + $0x8] sm:$0xff] %vm1032, %v1272
        %v1275 = vld [vmem:[#allocation4] sm:$0xff]
        %v1276 = vld [vmem:[#allocation4 + $0x8] sm:$0xff]
        %v1277 = vpack.c.bf16 %v1276, %v1275
        %v1278 = vld [vmem:[%s555] sm:$0xf]
        %v1279 = vld [vmem:[%s555 + $0x4] sm:$0xf]
        %v1280 = vld [vmem:[%s555 + $0x8] sm:$0xf]
        %v1281 = vld [vmem:[%s555 + $0xc] sm:$0xf]
        %v1286 = vunpack.c.l.b16 %v1278
        %v1287 = vunpack.c.l.b16 %v1279
        %v1288 = vunpack.c.l.b16 %v1280
        %v1289 = vunpack.c.l.b16 %v1281
        %v1290 = vpack.c.b16 %v1287, %v1286
        %v1291 = vpack.c.b16 %v1289, %v1288
        %v1295 = vsel %vm593, %v1277, 0
        %1297 = vmatpush.bf16.msra.mxu0 0
        %1298 = vmatpush.bf16.msra.mxu0 0
        %1299 = vmatpush.bf16.msra.mxu0 0
        %1300 = vmatpush.bf16.msra.mxu0 0
        %1301 = vmatpush.bf16.msra.mxu0 0
        %1302 = vmatpush.bf16.msra.mxu0 0
        %1303 = vmatpush.bf16.msra.mxu0 %v1291
        %1304 = vmatpush.bf16.msra.mxu0 %v1290
        %1305 = vmatmul.bf16.gmra.mxu0 %v1295
        %v1306 = vpop.f32.mrf.mxu0
        %v1307 = vadd.f32 0.0, %v1306
        %v1308 = vpop.f32.mrf.mxu0
        %v1309 = vadd.f32 0.0, %v1308
        %1310 = vdwg.mxu0
        %v1311 = vadd.f32 %v581, %v1307
        %v1312 = vadd.f32 %v582, %v1309
        %v1313 = vld [vmem:[%s558] sm:$0x1]
        %v1314 = vmul.f32 %v1311, %v1311
        %v1315 = vmul.f32 %v1312, %v1312
        %v1316 = vsel %vm593, %v1314, 0.0
        %1317 = vadd.xlane.f32.xlu0 %v1316
        %v1318 = vpop.xlane.xlu0 %1317
        %v1319 = vsel %vm593, %v1315, 0.0
        %1320 = vadd.xlane.f32.xlu0 %v1319
        %v1321 = vpop.xlane.xlu0 %1320
        %v1322 = vmul.f32 %v1318, %v606
        %v1323 = vmul.f32 %v1321, %v606
        %v1324 = vadd.f32 %v1322, 1e-06
        %v1325 = vadd.f32 %v1323, 1e-06
        %v1326 = vrsqrt.pop %v1324
        %v1327 = vmul.f32 %v1326, %v1324
        %v1328 = vmul.f32 %v1327, %v1326
        %v1329 = vmul.f32 0.5, %v1328
        %v1330 = vsub.f32 1.5, %v1329
        %v1331 = vmul.f32 %v1326, %v1330
        %vm1332 = vweird.f32 %v1324
        %vm1333 = vweird.f32 %v1326
        %vm1334 = vmor %vm1332, %vm1333
        %v1335 = vsel %vm1334, %v1326, %v1331
        %v1336 = vrsqrt.pop %v1325
        %v1337 = vmul.f32 %v1336, %v1325
        %v1338 = vmul.f32 %v1337, %v1336
        %v1339 = vmul.f32 0.5, %v1338
        %v1340 = vsub.f32 1.5, %v1339
        %v1341 = vmul.f32 %v1336, %v1340
        %vm1342 = vweird.f32 %v1325
        %vm1343 = vweird.f32 %v1336
        %vm1344 = vmor %vm1342, %vm1343
        %v1345 = vsel %vm1344, %v1336, %v1341
        %v1346 = vmul.f32 %v1311, %v1335
        %v1347 = vmul.f32 %v1312, %v1345
        %v1349 = vperm.slane %v1313, 0
        %v1351 = vmul.f32 %v1346, %v1349
        %v1352 = vmul.f32 %v1347, %v1349
        %v1353 = vpack.c.bf16 %v1352, %v1351
        %v1354 = vld [vmem:[%s563] sm:$0xf]
        %v1355 = vld [vmem:[%s563 + $0x4] sm:$0xf]
        %v1356 = vld [vmem:[%s563 + $0x8] sm:$0xf]
        %v1357 = vld [vmem:[%s563 + $0xc] sm:$0xf]
        %v1362 = vunpack.c.l.b16 %v1354
        %v1363 = vunpack.c.l.b16 %v1355
        %v1364 = vunpack.c.l.b16 %v1356
        %v1365 = vunpack.c.l.b16 %v1357
        %v1366 = vpack.c.b16 %v1363, %v1362
        %v1367 = vpack.c.b16 %v1365, %v1364
        %v1371 = vsel %vm593, %v1353, 0
        %1373 = vmatpush.bf16.msra.mxu0 0
        %1374 = vmatpush.bf16.msra.mxu0 0
        %1375 = vmatpush.bf16.msra.mxu0 0
        %1376 = vmatpush.bf16.msra.mxu0 0
        %1377 = vmatpush.bf16.msra.mxu0 0
        %1378 = vmatpush.bf16.msra.mxu0 0
        %1379 = vmatpush.bf16.msra.mxu0 %v1367
        %1380 = vmatpush.bf16.msra.mxu0 %v1366
        %1381 = vmatmul.bf16.gmra.mxu0 %v1371
        %v1382 = vpop.f32.mrf.mxu0
        %v1383 = vadd.f32 0.0, %v1382
        %v1384 = vpop.f32.mrf.mxu0
        %v1385 = vadd.f32 0.0, %v1384
        %1386 = vdwg.mxu0
        %v1387 = vsub.f32 0.0, %v1383
        %v1388 = vsub.f32 0.0, %v1385
        %v1389 = vmul.f32 %v1387, 1.442695
        %v1390 = vpow.pop %v1389
        %v1391 = vmul.f32 %v1388, 1.442695
        %v1392 = vpow.pop %v1391
        %v1393 = vadd.f32 %v1390, 1.0
        %v1394 = vadd.f32 %v1392, 1.0
        %v1395 = vrcp.pop %v1393
        %v1396 = vrcp.pop %v1394
        %v1397 = vmul.f32 %v1383, %v1395
        %v1398 = vmul.f32 %v1385, %v1396
        %1401 = vrot.lane.b32.xlu0 %v1383, 64
        %v1402 = vpop.permute.xlu0 %1401
        %1403 = vrot.lane.b32.xlu0 %v1385, 64
        %v1404 = vpop.permute.xlu0 %1403
        %v1407 = vmul.f32 %v1397, %v1402
        %v1408 = vmul.f32 %v1398, %v1404
        %v1409 = vpack.c.bf16 %v1408, %v1407
        %v1410 = vld [vmem:[%s568] sm:$0xf]
        %v1411 = vld [vmem:[%s568 + $0x4] sm:$0xf]
        %v1412 = vld [vmem:[%s568 + $0x8] sm:$0xf]
        %v1413 = vld [vmem:[%s568 + $0xc] sm:$0xf]
        %v1414 = vld [vmem:[%s568 + $0x10] sm:$0xf]
        %v1415 = vld [vmem:[%s568 + $0x14] sm:$0xf]
        %v1416 = vld [vmem:[%s568 + $0x18] sm:$0xf]
        %v1417 = vld [vmem:[%s568 + $0x1c] sm:$0xf]
        %v1426 = vunpack.c.l.b16 %v1410
        %v1427 = vunpack.c.l.b16 %v1411
        %v1428 = vunpack.c.l.b16 %v1412
        %v1429 = vunpack.c.l.b16 %v1413
        %v1430 = vunpack.c.l.b16 %v1414
        %v1431 = vunpack.c.l.b16 %v1415
        %v1432 = vunpack.c.l.b16 %v1416
        %v1433 = vunpack.c.l.b16 %v1417
        %v1434 = vpack.c.b16 %v1427, %v1426
        %v1435 = vpack.c.b16 %v1429, %v1428
        %v1436 = vpack.c.b16 %v1431, %v1430
        %v1437 = vpack.c.b16 %v1433, %v1432
        %vm1442 = vcmask 523264
        %v1444 = vsel %vm1442, %v1409, 0
        %1446 = vmatpush.bf16.msra.mxu0 0
        %1447 = vmatpush.bf16.msra.mxu0 0
        %1448 = vmatpush.bf16.msra.mxu0 0
        %1449 = vmatpush.bf16.msra.mxu0 0
        %1450 = vmatpush.bf16.msra.mxu0 %v1437
        %1451 = vmatpush.bf16.msra.mxu0 %v1436
        %1452 = vmatpush.bf16.msra.mxu0 %v1435
        %1453 = vmatpush.bf16.msra.mxu0 %v1434
        %1454 = vmatmul.bf16.gmra.mxu0 %v1444
        %v1455 = vpop.f32.mrf.mxu0
        %v1456 = vadd.f32 0.0, %v1455
        %v1457 = vpop.f32.mrf.mxu0
        %v1458 = vadd.f32 0.0, %v1457
        %1459 = vdwg.mxu0
        %v1460 = vadd.f32 %v1311, %v1456
        %v1461 = vadd.f32 %v1312, %v1458
        %1462 = vst.msk [vmem:[#allocation2] sm:$0xff] %vm593, %v1460
        %1463 = vst.msk [vmem:[#allocation2 + $0x8] sm:$0xff] %vm593, %v1461
        %p1464 = scmp.eq.s32.totalorder %s27, 1
        // Predicated region
        $region93: #{tpu_custom_call.1} parent=67 // pred_check
          %p1465 = pneg %p1464
        $region94: #{tpu_custom_call.1} parent=67 // pred_check_branch
          %1467 = sbr.rel (%p1465) target = $region96
        $region95: #{tpu_custom_call.1} parent=67 // pred_region
          %v1468 = vld [vmem:[%s11] sm:$0x1]
          %v1469 = vmul.f32 %v1460, %v1460
          %v1470 = vmul.f32 %v1461, %v1461
          %v1471 = vsel %vm593, %v1469, 0.0
          %1472 = vadd.xlane.f32.xlu0 %v1471
          %v1473 = vpop.xlane.xlu0 %1472
          %v1474 = vsel %vm593, %v1470, 0.0
          %1475 = vadd.xlane.f32.xlu0 %v1474
          %v1476 = vpop.xlane.xlu0 %1475
          %v1477 = vmul.f32 %v1473, %v606
          %v1478 = vmul.f32 %v1476, %v606
          %v1479 = vadd.f32 %v1477, 1e-06
          %v1480 = vadd.f32 %v1478, 1e-06
          %v1481 = vrsqrt.pop %v1479
          %v1482 = vmul.f32 %v1481, %v1479
          %v1483 = vmul.f32 %v1482, %v1481
          %v1484 = vmul.f32 0.5, %v1483
          %v1485 = vsub.f32 1.5, %v1484
          %v1486 = vmul.f32 %v1481, %v1485
          %vm1487 = vweird.f32 %v1479
          %vm1488 = vweird.f32 %v1481
          %vm1489 = vmor %vm1487, %vm1488
          %v1490 = vsel %vm1489, %v1481, %v1486
          %v1491 = vrsqrt.pop %v1480
          %v1492 = vmul.f32 %v1491, %v1480
          %v1493 = vmul.f32 %v1492, %v1491
          %v1494 = vmul.f32 0.5, %v1493
          %v1495 = vsub.f32 1.5, %v1494
          %v1496 = vmul.f32 %v1491, %v1495
          %vm1497 = vweird.f32 %v1480
          %vm1498 = vweird.f32 %v1491
          %vm1499 = vmor %vm1497, %vm1498
          %v1500 = vsel %vm1499, %v1491, %v1496
          %v1501 = vmul.f32 %v1460, %v1490
          %v1502 = vmul.f32 %v1461, %v1500
          %v1504 = vperm.slane %v1468, 0
          %v1506 = vmul.f32 %v1501, %v1504
          %v1507 = vmul.f32 %v1502, %v1504
          %v1508 = vpack.c.bf16 %v1506, %v1506
          %v1509 = vpack.c.bf16 %v1507, %v1507
          %vm1510 = vcmask 257024
          %1511 = vst.msk [vmem:[#allocation14] sm:$0xf] %vm1510, %v1508
          %1512 = vst.msk [vmem:[#allocation14 + $0x4] sm:$0xf] %vm1510, %v1509
        $region96: #{tpu_custom_call.1} parent=67 // pred_fallthru
          _
        // Predicated region
        $region97: #{tpu_custom_call.1} parent=67 // pred_check
          %p1513 = pneg %p322
        $region98: #{tpu_custom_call.1} parent=67 // pred_check_branch
          %1515 = sbr.rel (%p1513) target = $region100
        $region99: #{tpu_custom_call.1} parent=67 // pred_region
          %1517 = vsyncadd [#allocation7], 0
          %s1518 = sshll.u32 [#allocation14], 4
          %s1519 = int_to_ptr.vmem [resolvable:$true] %s1518
          %s1520 = sshll.u32 %s12, 4
          %s1521 = int_to_ptr.hbm [resolvable:$true] %s1520
          %1526 = dma.vmem_to_hbm [thread:$0]  %s1519, 128, %s1521, [#allocation7], 64, 64, 4
        $region100: #{tpu_custom_call.1} parent=67 // pred_fallthru
          _
        // Predicated region
        $region101: #{tpu_custom_call.1} parent=67 // pred_check
          %p1527 = pneg %p322
        $region102: #{tpu_custom_call.1} parent=67 // pred_check_branch
          %1529 = sbr.rel (%p1527) target = $region104
        $region103: #{tpu_custom_call.1} parent=67 // pred_region
          %1531 = dma.done [#allocation7], 128
        $region104: #{tpu_custom_call.1} parent=67 // pred_fallthru
          _
      $region68: #{tpu_custom_call.1} parent=5 // pred_fallthru
        _
      %p1532 = scmp.le.s32.totalorder 2, %s22
      // Predicated region
      $region105: #{tpu_custom_call.1} parent=5 // pred_check
        %p1533 = pneg %p1532
      $region106: #{tpu_custom_call.1} parent=5 // pred_check_branch
        %1535 = sbr.rel (%p1533) target = $region108
      $region107: #{tpu_custom_call.1} parent=5 // pred_region
        %s1536 = ssub.s32 %s22, 2
      $region108: #{tpu_custom_call.1} parent=5 // pred_fallthru
        _
    $region6: #{tpu_custom_call.1} parent=1 // loop_footer
      %s26 = sadd.s32 1, %s22
    $region7: #{tpu_custom_call.1} parent=1 // loop_footer_branch
      %21 = sbr.rel target = $region3
    $region8: #{tpu_custom_call.1} parent=1 // loop_exit
      _
    %1537 = vsyncpa [#allocation6], 1
    %s1538 = scalar_lea.sflag [#allocation6], 1
    %1539 = vsyncpa %s1538, 1
    %1540 = vsyncpa [#allocation9], 1
    %1541 = vsyncpa [#allocation12], 1
    %1542 = vsyncpa [#allocation7], 1
    %s1543 = scalar_lea.sflag [#allocation7], 1
    %1544 = vsyncpa %s1543, 1

</llo_original>
